<compile_context>
chip_gen: v7x
topology: tpu7x:2x2x1
jax: 0.10.0
libtpu: 0.0.40
codegen_flags: <defaults>
</compile_context>

<pallas_src>
import functools

import jax
import jax.numpy as jnp
from jax.experimental import pallas as pl
from jax.experimental.pallas import tpu as pltpu


# ---------------------------------------------------------------------------
# Fused kernel: per-batch  projections -> per-head attention -> fc_out
# ---------------------------------------------------------------------------
def _fused_attention_kernel(v_ref, k_ref, q_ref, bias_ref,
                            wvt_ref, wkt_ref, wqt_ref, wot_ref, bo_ref,
                            o_ref, *, heads, head_dim, scale):
    v = v_ref[0]          # (Lv, E)
    k = k_ref[0]          # (Lk, E)
    q = q_ref[0]          # (Lq, E)
    bias = bias_ref[0]    # (Lq, Lk)  additive mask bias (0 or -1e20)

    # Block-diagonal per-head projections, lane-dense over E:
    #   x @ kron(I_H, W.T)  ==  concat_h( x_h @ W.T )
    v_p = jnp.dot(v, wvt_ref[...], preferred_element_type=jnp.float32)
    k_p = jnp.dot(k, wkt_ref[...], preferred_element_type=jnp.float32)
    q_p = jnp.dot(q, wqt_ref[...], preferred_element_type=jnp.float32)

    Lq, E = q_p.shape
    dims = (((1,), (1,)), ((), ()))          # contract last dims (q @ k.T)

    acc = jnp.zeros((Lq, E), dtype=jnp.float32)
    for h in range(heads):                    # small H, fully unrolled
        lo = h * head_dim
        hi = lo + head_dim
        q_h = q_p[:, lo:hi]                   # (Lq, D)
        k_h = k_p[:, lo:hi]                   # (Lk, D)
        v_h = v_p[:, lo:hi]                   # (Lv, D)

        energy = jax.lax.dot_general(q_h, k_h, dims,
                                     preferred_element_type=jnp.float32)
        logits = (energy + bias) * scale      # mask-before-scale, like torch

        m = jnp.max(logits, axis=-1, keepdims=True)
        e = jnp.exp(logits - m)
        s = jnp.sum(e, axis=-1, keepdims=True)
        attn = e * pl.reciprocal(s, approx=True)

        head_out = jnp.dot(attn, v_h, preferred_element_type=jnp.float32)
        # fused fc_out:  concat_h(head_out) @ Wo.T == sum_h head_out @ Wo.T[hD:hD+D, :]
        acc = acc + jnp.dot(head_out, wot_ref[lo:hi, :],
                            preferred_element_type=jnp.float32)

    o_ref[0] = acc + bo_ref[...]              # bias broadcast over Lq


def self_attention_forward(values, keys, query, mask, params,
                           embed_size, heads):
    """values/keys/query: (N, L, E) float32; mask: (N, Lq, Lk) int32."""
    N, Lv, E = values.shape
    Lk = keys.shape[1]
    Lq = query.shape[1]
    D = E // heads

    # Hoisted weight prep (tiny, done once per call):
    eye = jnp.eye(heads, dtype=jnp.float32)
    wvt = jnp.kron(eye, params["Wv"].T)       # (E, E) block-diag of Wv.T
    wkt = jnp.kron(eye, params["Wk"].T)
    wqt = jnp.kron(eye, params["Wq"].T)
    wot = params["Wo"].T                      # (E, E)
    bo = params["bo"].reshape(1, E)

    # Additive mask bias: 0 where mask!=0, -1e20 where mask==0.
    bias = jnp.where(mask == 0, jnp.float32(-1e20), jnp.float32(0.0))

    scale = 1.0 / (float(embed_size) ** 0.5)
    kernel = functools.partial(_fused_attention_kernel,
                               heads=heads, head_dim=D, scale=scale)

    out = pl.pallas_call(
        kernel,
        out_shape=jax.ShapeDtypeStruct((N, Lq, E), jnp.float32),
        grid=(N,),
        in_specs=[
            pl.BlockSpec((1, Lv, E), lambda n: (n, 0, 0)),   # values
            pl.BlockSpec((1, Lk, E), lambda n: (n, 0, 0)),   # keys
            pl.BlockSpec((1, Lq, E), lambda n: (n, 0, 0)),   # query
            pl.BlockSpec((1, Lq, Lk), lambda n: (n, 0, 0)),  # mask bias
            pl.BlockSpec((E, E), lambda n: (0, 0)),          # kron Wv.T
            pl.BlockSpec((E, E), lambda n: (0, 0)),          # kron Wk.T
            pl.BlockSpec((E, E), lambda n: (0, 0)),          # kron Wq.T
            pl.BlockSpec((E, E), lambda n: (0, 0)),          # Wo.T
            pl.BlockSpec((1, E), lambda n: (0, 0)),          # bo
        ],
        out_specs=pl.BlockSpec((1, Lq, E), lambda n: (n, 0, 0)),
        compiler_params=pltpu.CompilerParams(
            dimension_semantics=("parallel",)),
    )(values, keys, query, bias, wvt, wkt, wqt, wot, bo)

    return out


# ---------------------------------------------------------------------------
# Pure-JAX reference that mirrors the PyTorch forward exactly.
# ---------------------------------------------------------------------------
def reference_forward(values, keys, query, mask, params, embed_size, heads):
    N, Lq, E = query.shape
    D = E // heads
    v = values.reshape(N, -1, heads, D)
    k = keys.reshape(N, -1, heads, D)
    q = query.reshape(N, -1, heads, D)
    v = jnp.einsum('nlhd,ed->nlhe', v, params["Wv"])
    k = jnp.einsum('nlhd,ed->nlhe', k, params["Wk"])
    q = jnp.einsum('nlhd,ed->nlhe', q, params["Wq"])
    energy = jnp.einsum('nqhd,nkhd->nhqk', q, k)
    energy = jnp.where(mask[:, None] == 0, jnp.float32(-1e20), energy)
    attention = jax.nn.softmax(energy / (float(embed_size) ** 0.5), axis=3)
    out = jnp.einsum('nhql,nlhd->nqhd', attention, v).reshape(N, Lq, E)
    return jnp.einsum('nqe,fe->nqf', out, params["Wo"]) + params["bo"]


if __name__ == "__main__":
    embed_size = 32
    heads = 4
    head_dim = embed_size // heads
    N, L = 2, 8

    key = jax.random.PRNGKey(0)
    kv, kk, kq, kwv, kwk, kwq, kwo, kbo = jax.random.split(key, 8)

    values = jax.random.normal(kv, (N, L, embed_size), dtype=jnp.float32)
    keys_in = jax.random.normal(kk, (N, L, embed_size), dtype=jnp.float32)
    query = jax.random.normal(kq, (N, L, embed_size), dtype=jnp.float32)

    # mask: (N, Lq, Lk) — zero out last 2 key positions of batch 1
    mask = jnp.ones((N, L, L), dtype=jnp.int32)
    mask = mask.at[1, :, -2:].set(0)

    params = {
        "Wv": 0.1 * jax.random.normal(kwv, (head_dim, head_dim), jnp.float32),
        "Wk": 0.1 * jax.random.normal(kwk, (head_dim, head_dim), jnp.float32),
        "Wq": 0.1 * jax.random.normal(kwq, (head_dim, head_dim), jnp.float32),
        "Wo": 0.1 * jax.random.normal(kwo, (embed_size, embed_size), jnp.float32),
        "bo": 0.1 * jax.random.normal(kbo, (embed_size,), jnp.float32),
    }

    out = self_attention_forward(values, keys_in, query, mask, params,
                                 embed_size, heads)
    out = jax.block_until_ready(out)

    ref = reference_forward(values, keys_in, query, mask, params,
                            embed_size, heads)
    assert out.shape == (N, L, embed_size)
    # Tolerance 2e-3 to allow for the EUP approximate reciprocal in softmax.
    assert jnp.allclose(out, ref, rtol=2e-3, atol=2e-3), "mismatch vs reference"

    print("KERNEL_OK")
</pallas_src>

<mosaic_0001>
module attributes {stable_mosaic.version = 11 : i64} {
  func.func @_fused_attention_kernel(%arg0: i32, %arg1: memref<1x8x32xf32, #tpu.memory_space<vmem>>, %arg2: memref<1x8x32xf32, #tpu.memory_space<vmem>>, %arg3: memref<1x8x32xf32, #tpu.memory_space<vmem>>, %arg4: memref<1x8x8xf32, #tpu.memory_space<vmem>>, %arg5: memref<32x32xf32, #tpu.memory_space<vmem>>, %arg6: memref<32x32xf32, #tpu.memory_space<vmem>>, %arg7: memref<32x32xf32, #tpu.memory_space<vmem>>, %arg8: memref<32x32xf32, #tpu.memory_space<vmem>>, %arg9: memref<1x32xf32, #tpu.memory_space<vmem>>, %arg10: memref<1x8x32xf32, #tpu.memory_space<vmem>>) attributes {dimension_semantics = [#tpu.dimension_semantics<parallel>], iteration_bounds = array<i64: 2>, scalar_prefetch = 0 : i64, scratch_operands = 0 : i64, tpu.core_type = #tpu.core_type<tc>, window_params = [{transform_indices = @transform_0, window_bounds = array<i64: 1, 8, 32>}, {transform_indices = @transform_1, window_bounds = array<i64: 1, 8, 32>}, {transform_indices = @transform_2, window_bounds = array<i64: 1, 8, 32>}, {transform_indices = @transform_3, window_bounds = array<i64: 1, 8, 8>}, {pipeline_mode = #tpu.pipeline_mode<synchronous>, transform_indices = @transform_4, window_bounds = array<i64: 32, 32>}, {pipeline_mode = #tpu.pipeline_mode<synchronous>, transform_indices = @transform_5, window_bounds = array<i64: 32, 32>}, {pipeline_mode = #tpu.pipeline_mode<synchronous>, transform_indices = @transform_6, window_bounds = array<i64: 32, 32>}, {pipeline_mode = #tpu.pipeline_mode<synchronous>, transform_indices = @transform_7, window_bounds = array<i64: 32, 32>}, {pipeline_mode = #tpu.pipeline_mode<synchronous>, transform_indices = @transform_8, window_bounds = array<i64: 1, 32>}, {transform_indices = @transform_9, window_bounds = array<i64: 1, 8, 32>}]} {
    %c0 = arith.constant 0 : index
    %c0_0 = arith.constant 0 : index
    %c0_1 = arith.constant 0 : index
    %0 = vector.load %arg1[%c0, %c0_0, %c0_1] : memref<1x8x32xf32, #tpu.memory_space<vmem>>, vector<1x8x32xf32>
    %1 = vector.shape_cast %0 : vector<1x8x32xf32> to vector<8x32xf32>
    %c0_2 = arith.constant 0 : index
    %c0_3 = arith.constant 0 : index
    %c0_4 = arith.constant 0 : index
    %2 = vector.load %arg2[%c0_2, %c0_3, %c0_4] : memref<1x8x32xf32, #tpu.memory_space<vmem>>, vector<1x8x32xf32>
    %3 = vector.shape_cast %2 : vector<1x8x32xf32> to vector<8x32xf32>
    %c0_5 = arith.constant 0 : index
    %c0_6 = arith.constant 0 : index
    %c0_7 = arith.constant 0 : index
    %4 = vector.load %arg3[%c0_5, %c0_6, %c0_7] : memref<1x8x32xf32, #tpu.memory_space<vmem>>, vector<1x8x32xf32>
    %5 = vector.shape_cast %4 : vector<1x8x32xf32> to vector<8x32xf32>
    %c0_8 = arith.constant 0 : index
    %c0_9 = arith.constant 0 : index
    %c0_10 = arith.constant 0 : index
    %6 = vector.load %arg4[%c0_8, %c0_9, %c0_10] : memref<1x8x8xf32, #tpu.memory_space<vmem>>, vector<1x8x8xf32>
    %7 = vector.shape_cast %6 : vector<1x8x8xf32> to vector<8x8xf32>
    %c0_11 = arith.constant 0 : index
    %c0_12 = arith.constant 0 : index
    %8 = vector.load %arg5[%c0_11, %c0_12] : memref<32x32xf32, #tpu.memory_space<vmem>>, vector<32x32xf32>
    %cst = arith.constant dense<0.000000e+00> : vector<8x32xf32>
    %9 = tpu.matmul %1, %8, %cst {dimension_numbers = #tpu.dot_dimension_numbers<[1], [0], [0], [1], [0, 0, 1, 1], [], []>} : vector<8x32xf32>, vector<32x32xf32>, vector<8x32xf32> -> vector<8x32xf32>
    %c0_13 = arith.constant 0 : index
    %c0_14 = arith.constant 0 : index
    %10 = vector.load %arg6[%c0_13, %c0_14] : memref<32x32xf32, #tpu.memory_space<vmem>>, vector<32x32xf32>
    %cst_15 = arith.constant dense<0.000000e+00> : vector<8x32xf32>
    %11 = tpu.matmul %3, %10, %cst_15 {dimension_numbers = #tpu.dot_dimension_numbers<[1], [0], [0], [1], [0, 0, 1, 1], [], []>} : vector<8x32xf32>, vector<32x32xf32>, vector<8x32xf32> -> vector<8x32xf32>
    %c0_16 = arith.constant 0 : index
    %c0_17 = arith.constant 0 : index
    %12 = vector.load %arg7[%c0_16, %c0_17] : memref<32x32xf32, #tpu.memory_space<vmem>>, vector<32x32xf32>
    %cst_18 = arith.constant dense<0.000000e+00> : vector<8x32xf32>
    %13 = tpu.matmul %5, %12, %cst_18 {dimension_numbers = #tpu.dot_dimension_numbers<[1], [0], [0], [1], [0, 0, 1, 1], [], []>} : vector<8x32xf32>, vector<32x32xf32>, vector<8x32xf32> -> vector<8x32xf32>
    %cst_19 = arith.constant 0.000000e+00 : f32
    %14 = vector.broadcast %cst_19 : f32 to vector<8x32xf32>
    %15 = vector.extract_strided_slice %13 {offsets = [0, 0], sizes = [8, 8], strides = [1, 1]} : vector<8x32xf32> to vector<8x8xf32>
    %16 = vector.extract_strided_slice %11 {offsets = [0, 0], sizes = [8, 8], strides = [1, 1]} : vector<8x32xf32> to vector<8x8xf32>
    %17 = vector.extract_strided_slice %9 {offsets = [0, 0], sizes = [8, 8], strides = [1, 1]} : vector<8x32xf32> to vector<8x8xf32>
    %cst_20 = arith.constant dense<0.000000e+00> : vector<8x8xf32>
    %18 = tpu.matmul %15, %16, %cst_20 {dimension_numbers = #tpu.dot_dimension_numbers<[1], [1], [0], [0], [0, 0, 1, 0], [], []>} : vector<8x8xf32>, vector<8x8xf32>, vector<8x8xf32> -> vector<8x8xf32>
    %19 = arith.addf %18, %7 : vector<8x8xf32>
    %cst_21 = arith.constant 0.176776692 : f32
    %20 = vector.broadcast %cst_21 : f32 to vector<8x8xf32>
    %21 = arith.mulf %19, %20 : vector<8x8xf32>
    %cst_22 = arith.constant dense<0xFF800000> : vector<8xf32>
    %22 = vector.multi_reduction <maximumf>, %21, %cst_22 [1] : vector<8x8xf32> to vector<8xf32>
    %23 = vector.shape_cast %22 : vector<8xf32> to vector<8x1xf32>
    %24 = vector.broadcast %23 : vector<8x1xf32> to vector<8x8xf32>
    %25 = arith.subf %21, %24 : vector<8x8xf32>
    %26 = math.exp %25 : vector<8x8xf32>
    %cst_23 = arith.constant dense<0.000000e+00> : vector<8xf32>
    %27 = vector.multi_reduction <add>, %26, %cst_23 [1] : vector<8x8xf32> to vector<8xf32>
    %28 = vector.shape_cast %27 : vector<8xf32> to vector<8x1xf32>
    %29 = tpu.reciprocal %28 {approx = true} : vector<8x1xf32> -> vector<8x1xf32>
    %30 = vector.broadcast %29 : vector<8x1xf32> to vector<8x8xf32>
    %31 = arith.mulf %26, %30 : vector<8x8xf32>
    %cst_24 = arith.constant dense<0.000000e+00> : vector<8x8xf32>
    %32 = tpu.matmul %31, %17, %cst_24 {dimension_numbers = #tpu.dot_dimension_numbers<[1], [0], [0], [1], [0, 0, 1, 1], [], []>} : vector<8x8xf32>, vector<8x8xf32>, vector<8x8xf32> -> vector<8x8xf32>
    %c0_25 = arith.constant 0 : index
    %c0_26 = arith.constant 0 : index
    %33 = vector.load %arg8[%c0_25, %c0_26] : memref<32x32xf32, #tpu.memory_space<vmem>>, vector<8x32xf32>
    %cst_27 = arith.constant dense<0.000000e+00> : vector<8x32xf32>
    %34 = tpu.matmul %32, %33, %cst_27 {dimension_numbers = #tpu.dot_dimension_numbers<[1], [0], [0], [1], [0, 0, 1, 1], [], []>} : vector<8x8xf32>, vector<8x32xf32>, vector<8x32xf32> -> vector<8x32xf32>
    %35 = arith.addf %14, %34 : vector<8x32xf32>
    %36 = vector.extract_strided_slice %13 {offsets = [0, 8], sizes = [8, 8], strides = [1, 1]} : vector<8x32xf32> to vector<8x8xf32>
    %37 = vector.extract_strided_slice %11 {offsets = [0, 8], sizes = [8, 8], strides = [1, 1]} : vector<8x32xf32> to vector<8x8xf32>
    %38 = vector.extract_strided_slice %9 {offsets = [0, 8], sizes = [8, 8], strides = [1, 1]} : vector<8x32xf32> to vector<8x8xf32>
    %cst_28 = arith.constant dense<0.000000e+00> : vector<8x8xf32>
    %39 = tpu.matmul %36, %37, %cst_28 {dimension_numbers = #tpu.dot_dimension_numbers<[1], [1], [0], [0], [0, 0, 1, 0], [], []>} : vector<8x8xf32>, vector<8x8xf32>, vector<8x8xf32> -> vector<8x8xf32>
    %40 = arith.addf %39, %7 : vector<8x8xf32>
    %cst_29 = arith.constant 0.176776692 : f32
    %41 = vector.broadcast %cst_29 : f32 to vector<8x8xf32>
    %42 = arith.mulf %40, %41 : vector<8x8xf32>
    %cst_30 = arith.constant dense<0xFF800000> : vector<8xf32>
    %43 = vector.multi_reduction <maximumf>, %42, %cst_30 [1] : vector<8x8xf32> to vector<8xf32>
    %44 = vector.shape_cast %43 : vector<8xf32> to vector<8x1xf32>
    %45 = vector.broadcast %44 : vector<8x1xf32> to vector<8x8xf32>
    %46 = arith.subf %42, %45 : vector<8x8xf32>
    %47 = math.exp %46 : vector<8x8xf32>
    %cst_31 = arith.constant dense<0.000000e+00> : vector<8xf32>
    %48 = vector.multi_reduction <add>, %47, %cst_31 [1] : vector<8x8xf32> to vector<8xf32>
    %49 = vector.shape_cast %48 : vector<8xf32> to vector<8x1xf32>
    %50 = tpu.reciprocal %49 {approx = true} : vector<8x1xf32> -> vector<8x1xf32>
    %51 = vector.broadcast %50 : vector<8x1xf32> to vector<8x8xf32>
    %52 = arith.mulf %47, %51 : vector<8x8xf32>
    %cst_32 = arith.constant dense<0.000000e+00> : vector<8x8xf32>
    %53 = tpu.matmul %52, %38, %cst_32 {dimension_numbers = #tpu.dot_dimension_numbers<[1], [0], [0], [1], [0, 0, 1, 1], [], []>} : vector<8x8xf32>, vector<8x8xf32>, vector<8x8xf32> -> vector<8x8xf32>
    %c8 = arith.constant 8 : index
    %c0_33 = arith.constant 0 : index
    %54 = vector.load %arg8[%c8, %c0_33] : memref<32x32xf32, #tpu.memory_space<vmem>>, vector<8x32xf32>
    %cst_34 = arith.constant dense<0.000000e+00> : vector<8x32xf32>
    %55 = tpu.matmul %53, %54, %cst_34 {dimension_numbers = #tpu.dot_dimension_numbers<[1], [0], [0], [1], [0, 0, 1, 1], [], []>} : vector<8x8xf32>, vector<8x32xf32>, vector<8x32xf32> -> vector<8x32xf32>
    %56 = arith.addf %35, %55 : vector<8x32xf32>
    %57 = vector.extract_strided_slice %13 {offsets = [0, 16], sizes = [8, 8], strides = [1, 1]} : vector<8x32xf32> to vector<8x8xf32>
    %58 = vector.extract_strided_slice %11 {offsets = [0, 16], sizes = [8, 8], strides = [1, 1]} : vector<8x32xf32> to vector<8x8xf32>
    %59 = vector.extract_strided_slice %9 {offsets = [0, 16], sizes = [8, 8], strides = [1, 1]} : vector<8x32xf32> to vector<8x8xf32>
    %cst_35 = arith.constant dense<0.000000e+00> : vector<8x8xf32>
    %60 = tpu.matmul %57, %58, %cst_35 {dimension_numbers = #tpu.dot_dimension_numbers<[1], [1], [0], [0], [0, 0, 1, 0], [], []>} : vector<8x8xf32>, vector<8x8xf32>, vector<8x8xf32> -> vector<8x8xf32>
    %61 = arith.addf %60, %7 : vector<8x8xf32>
    %cst_36 = arith.constant 0.176776692 : f32
    %62 = vector.broadcast %cst_36 : f32 to vector<8x8xf32>
    %63 = arith.mulf %61, %62 : vector<8x8xf32>
    %cst_37 = arith.constant dense<0xFF800000> : vector<8xf32>
    %64 = vector.multi_reduction <maximumf>, %63, %cst_37 [1] : vector<8x8xf32> to vector<8xf32>
    %65 = vector.shape_cast %64 : vector<8xf32> to vector<8x1xf32>
    %66 = vector.broadcast %65 : vector<8x1xf32> to vector<8x8xf32>
    %67 = arith.subf %63, %66 : vector<8x8xf32>
    %68 = math.exp %67 : vector<8x8xf32>
    %cst_38 = arith.constant dense<0.000000e+00> : vector<8xf32>
    %69 = vector.multi_reduction <add>, %68, %cst_38 [1] : vector<8x8xf32> to vector<8xf32>
    %70 = vector.shape_cast %69 : vector<8xf32> to vector<8x1xf32>
    %71 = tpu.reciprocal %70 {approx = true} : vector<8x1xf32> -> vector<8x1xf32>
    %72 = vector.broadcast %71 : vector<8x1xf32> to vector<8x8xf32>
    %73 = arith.mulf %68, %72 : vector<8x8xf32>
    %cst_39 = arith.constant dense<0.000000e+00> : vector<8x8xf32>
    %74 = tpu.matmul %73, %59, %cst_39 {dimension_numbers = #tpu.dot_dimension_numbers<[1], [0], [0], [1], [0, 0, 1, 1], [], []>} : vector<8x8xf32>, vector<8x8xf32>, vector<8x8xf32> -> vector<8x8xf32>
    %c16 = arith.constant 16 : index
    %c0_40 = arith.constant 0 : index
    %75 = vector.load %arg8[%c16, %c0_40] : memref<32x32xf32, #tpu.memory_space<vmem>>, vector<8x32xf32>
    %cst_41 = arith.constant dense<0.000000e+00> : vector<8x32xf32>
    %76 = tpu.matmul %74, %75, %cst_41 {dimension_numbers = #tpu.dot_dimension_numbers<[1], [0], [0], [1], [0, 0, 1, 1], [], []>} : vector<8x8xf32>, vector<8x32xf32>, vector<8x32xf32> -> vector<8x32xf32>
    %77 = arith.addf %56, %76 : vector<8x32xf32>
    %78 = vector.extract_strided_slice %13 {offsets = [0, 24], sizes = [8, 8], strides = [1, 1]} : vector<8x32xf32> to vector<8x8xf32>
    %79 = vector.extract_strided_slice %11 {offsets = [0, 24], sizes = [8, 8], strides = [1, 1]} : vector<8x32xf32> to vector<8x8xf32>
    %80 = vector.extract_strided_slice %9 {offsets = [0, 24], sizes = [8, 8], strides = [1, 1]} : vector<8x32xf32> to vector<8x8xf32>
    %cst_42 = arith.constant dense<0.000000e+00> : vector<8x8xf32>
    %81 = tpu.matmul %78, %79, %cst_42 {dimension_numbers = #tpu.dot_dimension_numbers<[1], [1], [0], [0], [0, 0, 1, 0], [], []>} : vector<8x8xf32>, vector<8x8xf32>, vector<8x8xf32> -> vector<8x8xf32>
    %82 = arith.addf %81, %7 : vector<8x8xf32>
    %cst_43 = arith.constant 0.176776692 : f32
    %83 = vector.broadcast %cst_43 : f32 to vector<8x8xf32>
    %84 = arith.mulf %82, %83 : vector<8x8xf32>
    %cst_44 = arith.constant dense<0xFF800000> : vector<8xf32>
    %85 = vector.multi_reduction <maximumf>, %84, %cst_44 [1] : vector<8x8xf32> to vector<8xf32>
    %86 = vector.shape_cast %85 : vector<8xf32> to vector<8x1xf32>
    %87 = vector.broadcast %86 : vector<8x1xf32> to vector<8x8xf32>
    %88 = arith.subf %84, %87 : vector<8x8xf32>
    %89 = math.exp %88 : vector<8x8xf32>
    %cst_45 = arith.constant dense<0.000000e+00> : vector<8xf32>
    %90 = vector.multi_reduction <add>, %89, %cst_45 [1] : vector<8x8xf32> to vector<8xf32>
    %91 = vector.shape_cast %90 : vector<8xf32> to vector<8x1xf32>
    %92 = tpu.reciprocal %91 {approx = true} : vector<8x1xf32> -> vector<8x1xf32>
    %93 = vector.broadcast %92 : vector<8x1xf32> to vector<8x8xf32>
    %94 = arith.mulf %89, %93 : vector<8x8xf32>
    %cst_46 = arith.constant dense<0.000000e+00> : vector<8x8xf32>
    %95 = tpu.matmul %94, %80, %cst_46 {dimension_numbers = #tpu.dot_dimension_numbers<[1], [0], [0], [1], [0, 0, 1, 1], [], []>} : vector<8x8xf32>, vector<8x8xf32>, vector<8x8xf32> -> vector<8x8xf32>
    %c24 = arith.constant 24 : index
    %c0_47 = arith.constant 0 : index
    %96 = vector.load %arg8[%c24, %c0_47] : memref<32x32xf32, #tpu.memory_space<vmem>>, vector<8x32xf32>
    %cst_48 = arith.constant dense<0.000000e+00> : vector<8x32xf32>
    %97 = tpu.matmul %95, %96, %cst_48 {dimension_numbers = #tpu.dot_dimension_numbers<[1], [0], [0], [1], [0, 0, 1, 1], [], []>} : vector<8x8xf32>, vector<8x32xf32>, vector<8x32xf32> -> vector<8x32xf32>
    %98 = arith.addf %77, %97 : vector<8x32xf32>
    %c0_49 = arith.constant 0 : index
    %c0_50 = arith.constant 0 : index
    %99 = vector.load %arg9[%c0_49, %c0_50] : memref<1x32xf32, #tpu.memory_space<vmem>>, vector<1x32xf32>
    %100 = vector.broadcast %99 : vector<1x32xf32> to vector<8x32xf32>
    %101 = arith.addf %98, %100 : vector<8x32xf32>
    %c0_51 = arith.constant 0 : index
    %c0_52 = arith.constant 0 : index
    %c0_53 = arith.constant 0 : index
    %102 = vector.load %arg10[%c0_51, %c0_52, %c0_53] : memref<1x8x32xf32, #tpu.memory_space<vmem>>, vector<1x8x32xf32>
    %103 = vector.shape_cast %102 : vector<1x8x32xf32> to vector<8x32xf32>
    %104 = vector.shape_cast %101 : vector<8x32xf32> to vector<1x8x32xf32>
    tpu.vector_store %arg10[%c0_51, %c0_52, %c0_53], %104 {strides = array<i32>} : memref<1x8x32xf32, #tpu.memory_space<vmem>>, vector<1x8x32xf32>,
    return
  }
  func.func @transform_0(%arg0: i32) -> (i32, i32, i32) {
    %c0_i32 = arith.constant 0 : i32
    %c0_i32_0 = arith.constant 0 : i32
    %c0_i32_1 = arith.constant 0 : i32
    return %arg0, %c0_i32, %c0_i32_0 : i32, i32, i32
  }
  func.func @transform_1(%arg0: i32) -> (i32, i32, i32) {
    %c0_i32 = arith.constant 0 : i32
    %c0_i32_0 = arith.constant 0 : i32
    %c0_i32_1 = arith.constant 0 : i32
    return %arg0, %c0_i32, %c0_i32_0 : i32, i32, i32
  }
  func.func @transform_2(%arg0: i32) -> (i32, i32, i32) {
    %c0_i32 = arith.constant 0 : i32
    %c0_i32_0 = arith.constant 0 : i32
    %c0_i32_1 = arith.constant 0 : i32
    return %arg0, %c0_i32, %c0_i32_0 : i32, i32, i32
  }
  func.func @transform_3(%arg0: i32) -> (i32, i32, i32) {
    %c0_i32 = arith.constant 0 : i32
    %c0_i32_0 = arith.constant 0 : i32
    %c0_i32_1 = arith.constant 0 : i32
    return %arg0, %c0_i32, %c0_i32_0 : i32, i32, i32
  }
  func.func @transform_4(%arg0: i32) -> (i32, i32) {
    %c0_i32 = arith.constant 0 : i32
    %c0_i32_0 = arith.constant 0 : i32
    %c0_i32_1 = arith.constant 0 : i32
    return %c0_i32, %c0_i32_0 : i32, i32
  }
  func.func @transform_5(%arg0: i32) -> (i32, i32) {
    %c0_i32 = arith.constant 0 : i32
    %c0_i32_0 = arith.constant 0 : i32
    %c0_i32_1 = arith.constant 0 : i32
    return %c0_i32, %c0_i32_0 : i32, i32
  }
  func.func @transform_6(%arg0: i32) -> (i32, i32) {
    %c0_i32 = arith.constant 0 : i32
    %c0_i32_0 = arith.constant 0 : i32
    %c0_i32_1 = arith.constant 0 : i32
    return %c0_i32, %c0_i32_0 : i32, i32
  }
  func.func @transform_7(%arg0: i32) -> (i32, i32) {
    %c0_i32 = arith.constant 0 : i32
    %c0_i32_0 = arith.constant 0 : i32
    %c0_i32_1 = arith.constant 0 : i32
    return %c0_i32, %c0_i32_0 : i32, i32
  }
  func.func @transform_8(%arg0: i32) -> (i32, i32) {
    %c0_i32 = arith.constant 0 : i32
    %c0_i32_0 = arith.constant 0 : i32
    %c0_i32_1 = arith.constant 0 : i32
    return %c0_i32, %c0_i32_0 : i32, i32
  }
  func.func @transform_9(%arg0: i32) -> (i32, i32, i32) {
    %c0_i32 = arith.constant 0 : i32
    %c0_i32_0 = arith.constant 0 : i32
    %c0_i32_1 = arith.constant 0 : i32
    return %arg0, %c0_i32, %c0_i32_0 : i32, i32, i32
  }
}

</mosaic_0001>

<llo_original>
// kernel: tpu_custom_call.1
$region0: #{tpu_custom_call.1}
  #allocation0 [shape = 'u32[]', space=smem, size = 0x4, offset = 0x4, fixed_abs, tag = 'smem constant byte address 0x4 - core index']
  #allocation1 [shape = 'u32[144,128]{1,0:T(1,128)}', space=vmem, size = 0x12000, scoped, tag = 'internal scratch']
  %s0 = inlined_call_operand.hbm [shape: f32[2,8,32], index: 0, kind: input, shape index: {}]
  %s1 = inlined_call_operand.hbm [shape: f32[2,8,32], index: 1, kind: input, shape index: {}]
  %s2 = inlined_call_operand.hbm [shape: f32[2,8,32], index: 2, kind: input, shape index: {}]
  %s3 = inlined_call_operand.hbm [shape: f32[2,8,8], index: 3, kind: input, shape index: {}]
  %s4 = inlined_call_operand.hbm [shape: f32[32,32], index: 4, kind: input, shape index: {}]
  %s5 = inlined_call_operand.hbm [shape: f32[32,32], index: 5, kind: input, shape index: {}]
  %s6 = inlined_call_operand.hbm [shape: f32[32,32], index: 6, kind: input, shape index: {}]
  %s7 = inlined_call_operand.hbm [shape: f32[32,32], index: 7, kind: input, shape index: {}]
  %s8 = inlined_call_operand.vmem [shape: f32[1,32], index: 8, kind: input, shape index: {}]
  %s9 = inlined_call_operand.hbm [shape: f32[2,8,32], index: 9, kind: output, shape index: {}]
  %s10 = sld [smem:[#allocation0]]
  $region101: #{tpu_custom_call.1} parent=0
    _
  %s12 = ssub.s32 1, %s10
  %s13 = scalar_select 0, %s12, %s10
  $region1: #{tpu_custom_call.1} parent=0
    #allocation2 [shape = 'u8[8192]{0}', space=vmem, size = 0x2000, scoped, tag = 'input window, operand 0']
    #allocation3 [shape = 's32[2]{0}', space=sflag, size = 0x8, scoped, tag = 'scoped memory for tpu_custom_call.1']
    #allocation4 [shape = 's32[2]{0}', space=sflag, size = 0x8, scoped, tag = 'scoped memory for tpu_custom_call.1']
    #allocation5 [shape = 'u8[8192]{0}', space=vmem, size = 0x2000, scoped, tag = 'input window, operand 1']
    #allocation6 [shape = 's32[2]{0}', space=sflag, size = 0x8, scoped, tag = 'scoped memory for tpu_custom_call.1']
    #allocation7 [shape = 'u8[8192]{0}', space=vmem, size = 0x2000, scoped, tag = 'input window, operand 2']
    #allocation8 [shape = 'u8[8192]{0}', space=vmem, size = 0x2000, scoped, tag = 'input window, operand 3']
    #allocation9 [shape = 's32[2]{0}', space=sflag, size = 0x8, scoped, tag = 'scoped memory for tpu_custom_call.1']
    #allocation10 [shape = 'u8[16384]{0}', space=vmem, size = 0x4000, scoped, tag = 'input window, operand 4, single buffered']
    #allocation11 [shape = 'u8[16384]{0}', space=vmem, size = 0x4000, scoped, tag = 'input window, operand 5, single buffered']
    #allocation12 [shape = 's32[1]{0}', space=sflag, size = 0x4, scoped, tag = 'scoped memory for tpu_custom_call.1']
    #allocation13 [shape = 'u8[16384]{0}', space=vmem, size = 0x4000, scoped, tag = 'input window, operand 6, single buffered']
    #allocation14 [shape = 'u8[16384]{0}', space=vmem, size = 0x4000, scoped, tag = 'input window, operand 7, single buffered']
    #allocation15 [shape = 's32[1]{0}', space=sflag, size = 0x4, scoped, tag = 'scoped memory for tpu_custom_call.1']
    #allocation16 [shape = 'u8[8192]{0}', space=vmem, size = 0x2000, scoped, tag = 'output window, operand 0']
    %14 = vsyncpa [#allocation3], 0
    %s15 = scalar_lea.sflag [#allocation3], 1
    %16 = vsyncpa %s15, 0
    %17 = vsyncpa [#allocation6], 0
    %s18 = scalar_lea.sflag [#allocation6], 1
    %19 = vsyncpa %s18, 0
    %20 = vsyncpa [#allocation9], 0
    %s21 = scalar_lea.sflag [#allocation9], 1
    %22 = vsyncpa %s21, 0
    %23 = vsyncpa [#allocation12], 0
    %24 = vsyncpa [#allocation15], 0
    %25 = vsyncpa [#allocation4], 0
    %s26 = scalar_lea.sflag [#allocation4], 1
    %27 = vsyncpa %s26, 0
    loop: start=0, step=1, limit=4
    $region2: #{tpu_custom_call.1} parent=1 // loop_pre_header
      _
    $region3: #{tpu_custom_call.1} parent=1 // loop_header
      %s29 = sphi 0, %s33
      %p30 = scmp.ge.s32.totalorder %s29, 4
      %s39 = sphi 0, %s41
      %s42 = sphi 0, %s39
      %s43 = sphi 0, %s42
      %s59 = sphi 0, %s43
      %s65 = sphi 0, %s67
      %s68 = sphi 0, %s65
      %s69 = sphi 0, %s68
      %s85 = sphi 0, %s69
      %s91 = sphi 0, %s93
      %s94 = sphi 0, %s91
      %s95 = sphi 0, %s94
      %s111 = sphi 0, %s95
      %s117 = sphi 0, %s119
      %s120 = sphi 0, %s117
      %s121 = sphi 0, %s120
      %s137 = sphi 0, %s121
      %s141 = sphi 0, %s141
      %s143 = sphi 0, %s141
      %s144 = sphi 0, %s143
      %s158 = sphi 0, %s144
      %s162 = sphi 0, %s162
      %s164 = sphi 0, %s162
      %s165 = sphi 0, %s164
      %s179 = sphi 0, %s165
      %s183 = sphi 0, %s183
      %s185 = sphi 0, %s183
      %s186 = sphi 0, %s185
      %s200 = sphi 0, %s186
      %s204 = sphi 0, %s204
      %s206 = sphi 0, %s204
      %s207 = sphi 0, %s206
      %s221 = sphi 0, %s207
      %s225 = sphi 0, %s225
      %s227 = sphi 0, %s225
      %s228 = sphi 0, %s227
      %s242 = sphi 0, %s228
      %s248 = sphi 0, %s250
      %s251 = sphi 0, %s248
      %s252 = sphi 0, %s251
      %s268 = sphi 0, %s252
    $region4: #{tpu_custom_call.1} parent=1 // loop_header_branch
      %32 = sbr.rel (%p30) target = $region8
    $region5: #{tpu_custom_call.1} parent=1 // loop_body
      %s34 = ssub.s32 %s29, 1
      %s35 = ssub.s32 %s29, 2
      %s36 = sadd.s32 %s29, 1
      %s37 = ssub.s32 %s29, %s36
      %p38 = scmp.eq.s32.totalorder %s37, 0
      %s40 = sadd.s32 %s39, 1
      %s41 = scalar_select %p38, %s39, %s40
      %p44 = pneg %p38
      %p45 = scmp.eq.s32.totalorder %s29, 1
      %p46 = por %p44, %p45
      %p47 = scmp.ne.s32.totalorder %s39, %s42
      %p48 = scmp.eq.s32.totalorder %s29, 0
      %p49 = por %p47, %p48
      %p50 = scmp.ne.s32.totalorder %s39, %s42
      %p51 = scmp.eq.s32.totalorder %s34, 1
      %p52 = por %p50, %p51
      %p53 = scmp.ne.s32.totalorder %s42, %s43
      %p54 = scmp.eq.s32.totalorder %s34, 0
      %p55 = por %p53, %p54
      %p56 = scmp.ne.s32.totalorder %s42, %s43
      %p57 = scmp.eq.s32.totalorder %s35, 1
      %p58 = por %p56, %p57
      %p60 = scmp.ne.s32.totalorder %s43, %s59
      %p61 = scmp.eq.s32.totalorder %s35, 0
      %p62 = por %p60, %p61
      %s63 = ssub.s32 %s29, %s36
      %p64 = scmp.eq.s32.totalorder %s63, 0
      %s66 = sadd.s32 %s65, 1
      %s67 = scalar_select %p64, %s65, %s66
      %p70 = pneg %p64
      %p71 = scmp.eq.s32.totalorder %s29, 1
      %p72 = por %p70, %p71
      %p73 = scmp.ne.s32.totalorder %s65, %s68
      %p74 = scmp.eq.s32.totalorder %s29, 0
      %p75 = por %p73, %p74
      %p76 = scmp.ne.s32.totalorder %s65, %s68
      %p77 = scmp.eq.s32.totalorder %s34, 1
      %p78 = por %p76, %p77
      %p79 = scmp.ne.s32.totalorder %s68, %s69
      %p80 = scmp.eq.s32.totalorder %s34, 0
      %p81 = por %p79, %p80
      %p82 = scmp.ne.s32.totalorder %s68, %s69
      %p83 = scmp.eq.s32.totalorder %s35, 1
      %p84 = por %p82, %p83
      %p86 = scmp.ne.s32.totalorder %s69, %s85
      %p87 = scmp.eq.s32.totalorder %s35, 0
      %p88 = por %p86, %p87
      %s89 = ssub.s32 %s29, %s36
      %p90 = scmp.eq.s32.totalorder %s89, 0
      %s92 = sadd.s32 %s91, 1
      %s93 = scalar_select %p90, %s91, %s92
      %p96 = pneg %p90
      %p97 = scmp.eq.s32.totalorder %s29, 1
      %p98 = por %p96, %p97
      %p99 = scmp.ne.s32.totalorder %s91, %s94
      %p100 = scmp.eq.s32.totalorder %s29, 0
      %p101 = por %p99, %p100
      %p102 = scmp.ne.s32.totalorder %s91, %s94
      %p103 = scmp.eq.s32.totalorder %s34, 1
      %p104 = por %p102, %p103
      %p105 = scmp.ne.s32.totalorder %s94, %s95
      %p106 = scmp.eq.s32.totalorder %s34, 0
      %p107 = por %p105, %p106
      %p108 = scmp.ne.s32.totalorder %s94, %s95
      %p109 = scmp.eq.s32.totalorder %s35, 1
      %p110 = por %p108, %p109
      %p112 = scmp.ne.s32.totalorder %s95, %s111
      %p113 = scmp.eq.s32.totalorder %s35, 0
      %p114 = por %p112, %p113
      %s115 = ssub.s32 %s29, %s36
      %p116 = scmp.eq.s32.totalorder %s115, 0
      %s118 = sadd.s32 %s117, 1
      %s119 = scalar_select %p116, %s117, %s118
      %p122 = pneg %p116
      %p123 = scmp.eq.s32.totalorder %s29, 1
      %p124 = por %p122, %p123
      %p125 = scmp.ne.s32.totalorder %s117, %s120
      %p126 = scmp.eq.s32.totalorder %s29, 0
      %p127 = por %p125, %p126
      %p128 = scmp.ne.s32.totalorder %s117, %s120
      %p129 = scmp.eq.s32.totalorder %s34, 1
      %p130 = por %p128, %p129
      %p131 = scmp.ne.s32.totalorder %s120, %s121
      %p132 = scmp.eq.s32.totalorder %s34, 0
      %p133 = por %p131, %p132
      %p134 = scmp.ne.s32.totalorder %s120, %s121
      %p135 = scmp.eq.s32.totalorder %s35, 1
      %p136 = por %p134, %p135
      %p138 = scmp.ne.s32.totalorder %s121, %s137
      %p139 = scmp.eq.s32.totalorder %s35, 0
      %p140 = por %p138, %p139
      %s142 = sadd.s32 %s141, 1
      %p145 = scmp.eq.s32.totalorder %s29, 1
      %p146 = scmp.ne.s32.totalorder %s141, %s143
      %p147 = scmp.eq.s32.totalorder %s29, 0
      %p148 = por %p146, %p147
      %p149 = scmp.ne.s32.totalorder %s141, %s143
      %p150 = scmp.eq.s32.totalorder %s34, 1
      %p151 = por %p149, %p150
      %p152 = scmp.ne.s32.totalorder %s143, %s144
      %p153 = scmp.eq.s32.totalorder %s34, 0
      %p154 = por %p152, %p153
      %p155 = scmp.ne.s32.totalorder %s143, %s144
      %p156 = scmp.eq.s32.totalorder %s35, 1
      %p157 = por %p155, %p156
      %p159 = scmp.ne.s32.totalorder %s144, %s158
      %p160 = scmp.eq.s32.totalorder %s35, 0
      %p161 = por %p159, %p160
      %s163 = sadd.s32 %s162, 1
      %p166 = scmp.eq.s32.totalorder %s29, 1
      %p167 = scmp.ne.s32.totalorder %s162, %s164
      %p168 = scmp.eq.s32.totalorder %s29, 0
      %p169 = por %p167, %p168
      %p170 = scmp.ne.s32.totalorder %s162, %s164
      %p171 = scmp.eq.s32.totalorder %s34, 1
      %p172 = por %p170, %p171
      %p173 = scmp.ne.s32.totalorder %s164, %s165
      %p174 = scmp.eq.s32.totalorder %s34, 0
      %p175 = por %p173, %p174
      %p176 = scmp.ne.s32.totalorder %s164, %s165
      %p177 = scmp.eq.s32.totalorder %s35, 1
      %p178 = por %p176, %p177
      %p180 = scmp.ne.s32.totalorder %s165, %s179
      %p181 = scmp.eq.s32.totalorder %s35, 0
      %p182 = por %p180, %p181
      %s184 = sadd.s32 %s183, 1
      %p187 = scmp.eq.s32.totalorder %s29, 1
      %p188 = scmp.ne.s32.totalorder %s183, %s185
      %p189 = scmp.eq.s32.totalorder %s29, 0
      %p190 = por %p188, %p189
      %p191 = scmp.ne.s32.totalorder %s183, %s185
      %p192 = scmp.eq.s32.totalorder %s34, 1
      %p193 = por %p191, %p192
      %p194 = scmp.ne.s32.totalorder %s185, %s186
      %p195 = scmp.eq.s32.totalorder %s34, 0
      %p196 = por %p194, %p195
      %p197 = scmp.ne.s32.totalorder %s185, %s186
      %p198 = scmp.eq.s32.totalorder %s35, 1
      %p199 = por %p197, %p198
      %p201 = scmp.ne.s32.totalorder %s186, %s200
      %p202 = scmp.eq.s32.totalorder %s35, 0
      %p203 = por %p201, %p202
      %s205 = sadd.s32 %s204, 1
      %p208 = scmp.eq.s32.totalorder %s29, 1
      %p209 = scmp.ne.s32.totalorder %s204, %s206
      %p210 = scmp.eq.s32.totalorder %s29, 0
      %p211 = por %p209, %p210
      %p212 = scmp.ne.s32.totalorder %s204, %s206
      %p213 = scmp.eq.s32.totalorder %s34, 1
      %p214 = por %p212, %p213
      %p215 = scmp.ne.s32.totalorder %s206, %s207
      %p216 = scmp.eq.s32.totalorder %s34, 0
      %p217 = por %p215, %p216
      %p218 = scmp.ne.s32.totalorder %s206, %s207
      %p219 = scmp.eq.s32.totalorder %s35, 1
      %p220 = por %p218, %p219
      %p222 = scmp.ne.s32.totalorder %s207, %s221
      %p223 = scmp.eq.s32.totalorder %s35, 0
      %p224 = por %p222, %p223
      %s226 = sadd.s32 %s225, 1
      %p229 = scmp.eq.s32.totalorder %s29, 1
      %p230 = scmp.ne.s32.totalorder %s225, %s227
      %p231 = scmp.eq.s32.totalorder %s29, 0
      %p232 = por %p230, %p231
      %p233 = scmp.ne.s32.totalorder %s225, %s227
      %p234 = scmp.eq.s32.totalorder %s34, 1
      %p235 = por %p233, %p234
      %p236 = scmp.ne.s32.totalorder %s227, %s228
      %p237 = scmp.eq.s32.totalorder %s34, 0
      %p238 = por %p236, %p237
      %p239 = scmp.ne.s32.totalorder %s227, %s228
      %p240 = scmp.eq.s32.totalorder %s35, 1
      %p241 = por %p239, %p240
      %p243 = scmp.ne.s32.totalorder %s228, %s242
      %p244 = scmp.eq.s32.totalorder %s35, 0
      %p245 = por %p243, %p244
      %s246 = ssub.s32 %s29, %s36
      %p247 = scmp.eq.s32.totalorder %s246, 0
      %s249 = sadd.s32 %s248, 1
      %s250 = scalar_select %p247, %s248, %s249
      %p253 = pneg %p247
      %p254 = scmp.eq.s32.totalorder %s29, 1
      %p255 = por %p253, %p254
      %p256 = scmp.ne.s32.totalorder %s248, %s251
      %p257 = scmp.eq.s32.totalorder %s29, 0
      %p258 = por %p256, %p257
      %p259 = scmp.ne.s32.totalorder %s248, %s251
      %p260 = scmp.eq.s32.totalorder %s34, 1
      %p261 = por %p259, %p260
      %p262 = scmp.ne.s32.totalorder %s251, %s252
      %p263 = scmp.eq.s32.totalorder %s34, 0
      %p264 = por %p262, %p263
      %p265 = scmp.ne.s32.totalorder %s251, %s252
      %p266 = scmp.eq.s32.totalorder %s35, 1
      %p267 = por %p265, %p266
      %p269 = scmp.ne.s32.totalorder %s252, %s268
      %p270 = scmp.eq.s32.totalorder %s35, 0
      %p271 = por %p269, %p270
      %p272 = scmp.le.s32.totalorder 1, %s29
      %p273 = scmp.lt.s32.totalorder %s29, 3
      %p274 = pnand %p272, %p273
      %p275 = pneg %p274
      // Predicated region
      $region9: #{tpu_custom_call.1} parent=5 // pred_check
        _
      $region10: #{tpu_custom_call.1} parent=5 // pred_check_branch
        %277 = sbr.rel (%p274) target = $region12
      $region11: #{tpu_custom_call.1} parent=5 // pred_region
        %s278 = ssub.s32 %s29, 1
        // Predicated region
        $region13: #{tpu_custom_call.1} parent=11 // pred_check
          %p279 = pneg %p154
        $region14: #{tpu_custom_call.1} parent=11 // pred_check_branch
          %281 = sbr.rel (%p279) target = $region16
        $region15: #{tpu_custom_call.1} parent=11 // pred_region
          %s283 = ssub.s32 512, 512
          %284 = vsyncadd [#allocation9], %s283
          %s285 = sshll.u32 [#allocation10], 4
          %s286 = int_to_ptr.vmem [resolvable:$true] %s285
          %291 = dma.hbm_to_vmem [thread:$0]  %s4, 512, %s286, [#allocation9], 128, 128, 8
        $region16: #{tpu_custom_call.1} parent=11 // pred_fallthru
          _
        // Predicated region
        $region17: #{tpu_custom_call.1} parent=11 // pred_check
          %p292 = pneg %p175
        $region18: #{tpu_custom_call.1} parent=11 // pred_check_branch
          %294 = sbr.rel (%p292) target = $region20
        $region19: #{tpu_custom_call.1} parent=11 // pred_region
          %s296 = ssub.s32 512, 512
          %297 = vsyncadd [#allocation12], %s296
          %s298 = sshll.u32 [#allocation11], 4
          %s299 = int_to_ptr.vmem [resolvable:$true] %s298
          %304 = dma.hbm_to_vmem [thread:$0]  %s5, 512, %s299, [#allocation12], 128, 128, 8
        $region20: #{tpu_custom_call.1} parent=11 // pred_fallthru
          _
        // Predicated region
        $region21: #{tpu_custom_call.1} parent=11 // pred_check
          %p305 = pneg %p196
        $region22: #{tpu_custom_call.1} parent=11 // pred_check_branch
          %307 = sbr.rel (%p305) target = $region24
        $region23: #{tpu_custom_call.1} parent=11 // pred_region
          %s309 = ssub.s32 512, 512
          %310 = vsyncadd [#allocation12], %s309
          %s311 = sshll.u32 [#allocation13], 4
          %s312 = int_to_ptr.vmem [resolvable:$true] %s311
          %317 = dma.hbm_to_vmem [thread:$0]  %s6, 512, %s312, [#allocation12], 128, 128, 8
        $region24: #{tpu_custom_call.1} parent=11 // pred_fallthru
          _
        // Predicated region
        $region25: #{tpu_custom_call.1} parent=11 // pred_check
          %p318 = pneg %p217
        $region26: #{tpu_custom_call.1} parent=11 // pred_check_branch
          %320 = sbr.rel (%p318) target = $region28
        $region27: #{tpu_custom_call.1} parent=11 // pred_region
          %s322 = ssub.s32 512, 512
          %323 = vsyncadd [#allocation15], %s322
          %s324 = sshll.u32 [#allocation14], 4
          %s325 = int_to_ptr.vmem [resolvable:$true] %s324
          %330 = dma.hbm_to_vmem [thread:$0]  %s7, 512, %s325, [#allocation15], 128, 128, 8
        $region28: #{tpu_custom_call.1} parent=11 // pred_fallthru
          _
        // Predicated region
        $region29: #{tpu_custom_call.1} parent=11 // pred_check
          %p331 = pneg %p238
        $region30: #{tpu_custom_call.1} parent=11 // pred_check_branch
          %333 = sbr.rel (%p331) target = $region32
        $region31: #{tpu_custom_call.1} parent=11 // pred_region
          _
        $region32: #{tpu_custom_call.1} parent=11 // pred_fallthru
          _
      $region12: #{tpu_custom_call.1} parent=5 // pred_fallthru
        _
      %p334 = scmp.lt.s32.totalorder %s29, 2
      // Predicated region
      $region33: #{tpu_custom_call.1} parent=5 // pred_check
        %p335 = pneg %p334
      $region34: #{tpu_custom_call.1} parent=5 // pred_check_branch
        %337 = sbr.rel (%p335) target = $region36
      $region35: #{tpu_custom_call.1} parent=5 // pred_region
        // Predicated region
        $region37: #{tpu_custom_call.1} parent=35 // pred_check
          %p338 = pneg %p49
        $region38: #{tpu_custom_call.1} parent=35 // pred_check_branch
          %340 = sbr.rel (%p338) target = $region40
        $region39: #{tpu_custom_call.1} parent=35 // pred_region
          %s341 = sand.u32 %s39, 1
          %s342 = scalar_lea.sflag [#allocation3], %s341
          %s343 = sand.u32 %s39, 1
          %s344 = smul.addr %s343, 8
          %s345 = scalar_lea.vmem [#allocation2], %s344
          %s347 = ssub.s32 128, 128
          %348 = vsyncadd %s342, %s347
          %s349 = smul.addr %s29, 128
          %s350 = scalar_lea.hbm %s0, %s349
          %s352 = sshll.u32 %s345, 4
          %s353 = int_to_ptr.vmem [resolvable:$true] %s352
          %355 = dma.hbm_to_vmem [thread:$0]  %s350, 128, %s353, %s342
        $region40: #{tpu_custom_call.1} parent=35 // pred_fallthru
          _
        // Predicated region
        $region41: #{tpu_custom_call.1} parent=35 // pred_check
          %p356 = pneg %p75
        $region42: #{tpu_custom_call.1} parent=35 // pred_check_branch
          %358 = sbr.rel (%p356) target = $region44
        $region43: #{tpu_custom_call.1} parent=35 // pred_region
          %s359 = sand.u32 %s29, 1
          %s360 = scalar_lea.sflag [#allocation6], %s359
          %s361 = sand.u32 %s65, 1
          %s362 = smul.addr %s361, 8
          %s363 = scalar_lea.vmem [#allocation5], %s362
          %s365 = ssub.s32 128, 128
          %366 = vsyncadd %s360, %s365
          %s367 = smul.addr %s29, 128
          %s368 = scalar_lea.hbm %s1, %s367
          %s370 = sshll.u32 %s363, 4
          %s371 = int_to_ptr.vmem [resolvable:$true] %s370
          %373 = dma.hbm_to_vmem [thread:$0]  %s368, 128, %s371, %s360
        $region44: #{tpu_custom_call.1} parent=35 // pred_fallthru
          _
        // Predicated region
        $region45: #{tpu_custom_call.1} parent=35 // pred_check
          %p374 = pneg %p101
        $region46: #{tpu_custom_call.1} parent=35 // pred_check_branch
          %376 = sbr.rel (%p374) target = $region48
        $region47: #{tpu_custom_call.1} parent=35 // pred_region
          %s377 = sand.u32 %s29, 1
          %s378 = scalar_lea.sflag [#allocation6], %s377
          %s379 = sand.u32 %s91, 1
          %s380 = smul.addr %s379, 8
          %s381 = scalar_lea.vmem [#allocation7], %s380
          %s383 = ssub.s32 128, 128
          %384 = vsyncadd %s378, %s383
          %s385 = smul.addr %s29, 128
          %s386 = scalar_lea.hbm %s2, %s385
          %s388 = sshll.u32 %s381, 4
          %s389 = int_to_ptr.vmem [resolvable:$true] %s388
          %391 = dma.hbm_to_vmem [thread:$0]  %s386, 128, %s389, %s378
        $region48: #{tpu_custom_call.1} parent=35 // pred_fallthru
          _
        // Predicated region
        $region49: #{tpu_custom_call.1} parent=35 // pred_check
          %p392 = pneg %p127
        $region50: #{tpu_custom_call.1} parent=35 // pred_check_branch
          %394 = sbr.rel (%p392) target = $region52
        $region51: #{tpu_custom_call.1} parent=35 // pred_region
          %s395 = sand.u32 %s29, 1
          %s396 = scalar_lea.sflag [#allocation9], %s395
          %s397 = sand.u32 %s117, 1
          %s398 = smul.addr %s397, 8
          %s399 = scalar_lea.vmem [#allocation8], %s398
          %s401 = ssub.s32 128, 128
          %402 = vsyncadd %s396, %s401
          %s403 = smul.addr %s29, 128
          %s404 = scalar_lea.hbm %s3, %s403
          %s406 = sshll.u32 %s399, 4
          %s407 = int_to_ptr.vmem [resolvable:$true] %s406
          %409 = dma.hbm_to_vmem [thread:$0]  %s404, 128, %s407, %s396
        $region52: #{tpu_custom_call.1} parent=35 // pred_fallthru
          _
      $region36: #{tpu_custom_call.1} parent=5 // pred_fallthru
        _
      %p410 = scmp.le.s32.totalorder 1, %s29
      %p411 = scmp.lt.s32.totalorder %s29, 3
      %p412 = pnand %p410, %p411
      %p413 = pneg %p412
      // Predicated region
      $region53: #{tpu_custom_call.1} parent=5 // pred_check
        _
      $region54: #{tpu_custom_call.1} parent=5 // pred_check_branch
        %415 = sbr.rel (%p412) target = $region56
      $region55: #{tpu_custom_call.1} parent=5 // pred_region
        %s416 = ssub.s32 %s29, 1
        %s417 = sand.u32 %s42, 1
        %s418 = scalar_lea.sflag [#allocation3], %s417
        %s419 = sand.u32 %s42, 1
        %s420 = smul.addr %s419, 8
        %s421 = scalar_lea.vmem [#allocation2], %s420
        // Predicated region
        $region57: #{tpu_custom_call.1} parent=55 // pred_check
          %p422 = pneg %p55
        $region58: #{tpu_custom_call.1} parent=55 // pred_check_branch
          %424 = sbr.rel (%p422) target = $region60
        $region59: #{tpu_custom_call.1} parent=55 // pred_region
          %425 = dma.done %s418, 128
        $region60: #{tpu_custom_call.1} parent=55 // pred_fallthru
          _
        %s426 = sand.u32 %s34, 1
        %s427 = scalar_lea.sflag [#allocation6], %s426
        %s428 = sand.u32 %s68, 1
        %s429 = smul.addr %s428, 8
        %s430 = scalar_lea.vmem [#allocation5], %s429
        // Predicated region
        $region61: #{tpu_custom_call.1} parent=55 // pred_check
          %p431 = pneg %p81
        $region62: #{tpu_custom_call.1} parent=55 // pred_check_branch
          %433 = sbr.rel (%p431) target = $region64
        $region63: #{tpu_custom_call.1} parent=55 // pred_region
          %434 = dma.done %s427, 128
        $region64: #{tpu_custom_call.1} parent=55 // pred_fallthru
          _
        %s435 = sand.u32 %s34, 1
        %s436 = scalar_lea.sflag [#allocation6], %s435
        %s437 = sand.u32 %s94, 1
        %s438 = smul.addr %s437, 8
        %s439 = scalar_lea.vmem [#allocation7], %s438
        // Predicated region
        $region65: #{tpu_custom_call.1} parent=55 // pred_check
          %p440 = pneg %p107
        $region66: #{tpu_custom_call.1} parent=55 // pred_check_branch
          %442 = sbr.rel (%p440) target = $region68
        $region67: #{tpu_custom_call.1} parent=55 // pred_region
          %443 = dma.done %s436, 128
        $region68: #{tpu_custom_call.1} parent=55 // pred_fallthru
          _
        %s444 = sand.u32 %s34, 1
        %s445 = scalar_lea.sflag [#allocation9], %s444
        %s446 = sand.u32 %s120, 1
        %s447 = smul.addr %s446, 8
        %s448 = scalar_lea.vmem [#allocation8], %s447
        // Predicated region
        $region69: #{tpu_custom_call.1} parent=55 // pred_check
          %p449 = pneg %p133
        $region70: #{tpu_custom_call.1} parent=55 // pred_check_branch
          %451 = sbr.rel (%p449) target = $region72
        $region71: #{tpu_custom_call.1} parent=55 // pred_region
          %452 = dma.done %s445, 128
        $region72: #{tpu_custom_call.1} parent=55 // pred_fallthru
          _
        // Predicated region
        $region73: #{tpu_custom_call.1} parent=55 // pred_check
          %p453 = pneg %p154
        $region74: #{tpu_custom_call.1} parent=55 // pred_check_branch
          %455 = sbr.rel (%p453) target = $region76
        $region75: #{tpu_custom_call.1} parent=55 // pred_region
          %456 = dma.done [#allocation9], 512
        $region76: #{tpu_custom_call.1} parent=55 // pred_fallthru
          _
        // Predicated region
        $region77: #{tpu_custom_call.1} parent=55 // pred_check
          %p457 = pneg %p175
        $region78: #{tpu_custom_call.1} parent=55 // pred_check_branch
          %459 = sbr.rel (%p457) target = $region80
        $region79: #{tpu_custom_call.1} parent=55 // pred_region
          %460 = dma.done [#allocation12], 512
        $region80: #{tpu_custom_call.1} parent=55 // pred_fallthru
          _
        // Predicated region
        $region81: #{tpu_custom_call.1} parent=55 // pred_check
          %p461 = pneg %p196
        $region82: #{tpu_custom_call.1} parent=55 // pred_check_branch
          %463 = sbr.rel (%p461) target = $region84
        $region83: #{tpu_custom_call.1} parent=55 // pred_region
          %464 = dma.done [#allocation12], 512
        $region84: #{tpu_custom_call.1} parent=55 // pred_fallthru
          _
        // Predicated region
        $region85: #{tpu_custom_call.1} parent=55 // pred_check
          %p465 = pneg %p217
        $region86: #{tpu_custom_call.1} parent=55 // pred_check_branch
          %467 = sbr.rel (%p465) target = $region88
        $region87: #{tpu_custom_call.1} parent=55 // pred_region
          %468 = dma.done [#allocation15], 512
        $region88: #{tpu_custom_call.1} parent=55 // pred_fallthru
          _
        %s469 = sand.u32 %s42, 1
        %s470 = scalar_lea.sflag [#allocation3], %s469
        %s471 = sand.u32 %s42, 1
        %s472 = smul.addr %s471, 8
        %s473 = scalar_lea.vmem [#allocation2], %s472
        %p474 = pneg %p55
        %p475 = pneg %p52
        %s476 = sand.u32 %s34, 1
        %s477 = scalar_lea.sflag [#allocation6], %s476
        %s478 = sand.u32 %s68, 1
        %s479 = smul.addr %s478, 8
        %s480 = scalar_lea.vmem [#allocation5], %s479
        %p481 = pneg %p81
        %p482 = pneg %p78
        %s483 = sand.u32 %s34, 1
        %s484 = scalar_lea.sflag [#allocation6], %s483
        %s485 = sand.u32 %s94, 1
        %s486 = smul.addr %s485, 8
        %s487 = scalar_lea.vmem [#allocation7], %s486
        %p488 = pneg %p107
        %p489 = pneg %p104
        %s490 = sand.u32 %s34, 1
        %s491 = scalar_lea.sflag [#allocation9], %s490
        %s492 = sand.u32 %s120, 1
        %s493 = smul.addr %s492, 8
        %s494 = scalar_lea.vmem [#allocation8], %s493
        %p495 = pneg %p133
        %p496 = pneg %p130
        %p497 = pneg %p154
        %p498 = pneg %p151
        %p499 = pneg %p175
        %p500 = pneg %p172
        %p501 = pneg %p196
        %p502 = pneg %p193
        %p503 = pneg %p217
        %p504 = pneg %p214
        %p505 = pneg %p238
        %p506 = pneg %p235
        %p507 = pneg %p264
        %p508 = pneg %p261
        %s509 = sand.u32 %s251, 1
        %s510 = scalar_lea.sflag [#allocation4], %s509
        %s511 = sand.u32 %s251, 1
        %s512 = smul.addr %s511, 8
        %s513 = scalar_lea.vmem [#allocation16], %s512
        %v514 = vld [vmem:[%s421] sm:$0xff]
        %v515 = vld [vmem:[%s430] sm:$0xff]
        %v516 = vld [vmem:[%s439] sm:$0xff]
        %v517 = vld [vmem:[%s448] sm:$0xff]
        %v518 = vld [vmem:[#allocation10] sm:$0xff]
        %v519 = vld [vmem:[#allocation10 + $0x8] sm:$0xff]
        %v520 = vld [vmem:[#allocation10 + $0x10] sm:$0xff]
        %v521 = vld [vmem:[#allocation10 + $0x18] sm:$0xff]
        %vm522 = vcmask 261120
        %v524 = vsel %vm522, %v514, 0
        %526 = vmatprep.subr.mxu0 0.0
        %527 = vmatpush1.msra.mxu0 %v518
        %528 = vmatprep.subr.mxu0 0.0
        %529 = vmatpush1.msra.mxu0 %v519
        %530 = vmatprep.subr.mxu0 0.0
        %531 = vmatpush1.msra.mxu0 %v520
        %532 = vmatprep.subr.mxu0 0.0
        %533 = vmatpush1.msra.mxu0 %v521
        %534 = vmatprep.subr.mxu0 0.0
        %535 = vmatpush1.msra.mxu0 0.0
        %536 = vmatprep.subr.mxu0 0.0
        %537 = vmatpush1.msra.mxu0 0.0
        %538 = vmatprep.subr.mxu0 0.0
        %539 = vmatpush1.msra.mxu0 0.0
        %540 = vmatprep.subr.mxu0 0.0
        %541 = vmatpush1.msra.mxu0 0.0
        %542 = vmatprep.subr.mxu0 0.0
        %543 = vmatpush1.msra.mxu0 0.0
        %544 = vmatprep.subr.mxu0 0.0
        %545 = vmatpush1.msra.mxu0 0.0
        %546 = vmatprep.subr.mxu0 0.0
        %547 = vmatpush1.msra.mxu0 0.0
        %548 = vmatprep.subr.mxu0 0.0
        %549 = vmatpush1.msra.mxu0 0.0
        %550 = vmatprep.subr.mxu0 0.0
        %551 = vmatpush1.msra.mxu0 0.0
        %552 = vmatprep.subr.mxu0 0.0
        %553 = vmatpush1.msra.mxu0 0.0
        %554 = vmatprep.subr.mxu0 0.0
        %555 = vmatpush1.msra.mxu0 0.0
        %556 = vmatprep.subr.mxu0 0.0
        %557 = vmatpush1.msra.mxu0 0.0
        %558 = vmatprep.subr.mxu0 0.0
        %559 = vmatpush1.msra.mxu0 0.0
        %560 = vmatprep.subr.mxu0 0.0
        %561 = vmatpush1.msra.mxu0 0.0
        %562 = vmatprep.subr.mxu0 0.0
        %563 = vmatpush1.msra.mxu0 0.0
        %564 = vmatprep.subr.mxu0 0.0
        %565 = vmatpush1.msra.mxu0 0.0
        %566 = vmatprep.subr.mxu0 0.0
        %567 = vmatpush1.msra.mxu0 0.0
        %568 = vmatprep.subr.mxu0 0.0
        %569 = vmatpush1.msra.mxu0 0.0
        %570 = vmatprep.subr.mxu0 0.0
        %571 = vmatpush1.msra.mxu0 0.0
        %572 = vmatprep.subr.mxu0 0.0
        %573 = vmatpush1.msra.mxu0 0.0
        %574 = vmatprep.subr.mxu0 0.0
        %575 = vmatpush1.msra.mxu0 0.0
        %576 = vmatprep.subr.mxu0 0.0
        %577 = vmatpush1.msra.mxu0 0.0
        %578 = vmatprep.subr.mxu0 0.0
        %579 = vmatpush1.msra.mxu0 0.0
        %580 = vmatprep.subr.mxu0 0.0
        %581 = vmatpush1.msra.mxu0 0.0
        %582 = vmatprep.subr.mxu0 0.0
        %583 = vmatpush1.msra.mxu0 0.0
        %584 = vmatprep.subr.mxu0 0.0
        %585 = vmatpush1.msra.mxu0 0.0
        %586 = vmatprep.subr.mxu0 0.0
        %587 = vmatpush1.msra.mxu0 0.0
        %588 = vmatprep.subr.mxu0 0.0
        %589 = vmatpush1.msra.mxu0 0.0
        %590 = vmatprep.mubr.f32.mxu0 0.0
        %591 = vmatmul.mubr.f32.gmra.mrb[0].mxu0 %v524
        %v592 = vpop.f32.mrb[0].mxu0
        %v593 = vadd.f32 0.0, %v592
        %v594 = vpop.f32.mrb[0].mxu0
        %595 = vdwg.mxu0
        %v596 = vld [vmem:[#allocation11] sm:$0xff]
        %v597 = vld [vmem:[#allocation11 + $0x8] sm:$0xff]
        %v598 = vld [vmem:[#allocation11 + $0x10] sm:$0xff]
        %v599 = vld [vmem:[#allocation11 + $0x18] sm:$0xff]
        %v601 = vsel %vm522, %v515, 0
        %603 = vmatprep.subr.mxu0 0.0
        %604 = vmatpush1.msra.mxu0 %v596
        %605 = vmatprep.subr.mxu0 0.0
        %606 = vmatpush1.msra.mxu0 %v597
        %607 = vmatprep.subr.mxu0 0.0
        %608 = vmatpush1.msra.mxu0 %v598
        %609 = vmatprep.subr.mxu0 0.0
        %610 = vmatpush1.msra.mxu0 %v599
        %611 = vmatprep.subr.mxu0 0.0
        %612 = vmatpush1.msra.mxu0 0.0
        %613 = vmatprep.subr.mxu0 0.0
        %614 = vmatpush1.msra.mxu0 0.0
        %615 = vmatprep.subr.mxu0 0.0
        %616 = vmatpush1.msra.mxu0 0.0
        %617 = vmatprep.subr.mxu0 0.0
        %618 = vmatpush1.msra.mxu0 0.0
        %619 = vmatprep.subr.mxu0 0.0
        %620 = vmatpush1.msra.mxu0 0.0
        %621 = vmatprep.subr.mxu0 0.0
        %622 = vmatpush1.msra.mxu0 0.0
        %623 = vmatprep.subr.mxu0 0.0
        %624 = vmatpush1.msra.mxu0 0.0
        %625 = vmatprep.subr.mxu0 0.0
        %626 = vmatpush1.msra.mxu0 0.0
        %627 = vmatprep.subr.mxu0 0.0
        %628 = vmatpush1.msra.mxu0 0.0
        %629 = vmatprep.subr.mxu0 0.0
        %630 = vmatpush1.msra.mxu0 0.0
        %631 = vmatprep.subr.mxu0 0.0
        %632 = vmatpush1.msra.mxu0 0.0
        %633 = vmatprep.subr.mxu0 0.0
        %634 = vmatpush1.msra.mxu0 0.0
        %635 = vmatprep.subr.mxu0 0.0
        %636 = vmatpush1.msra.mxu0 0.0
        %637 = vmatprep.subr.mxu0 0.0
        %638 = vmatpush1.msra.mxu0 0.0
        %639 = vmatprep.subr.mxu0 0.0
        %640 = vmatpush1.msra.mxu0 0.0
        %641 = vmatprep.subr.mxu0 0.0
        %642 = vmatpush1.msra.mxu0 0.0
        %643 = vmatprep.subr.mxu0 0.0
        %644 = vmatpush1.msra.mxu0 0.0
        %645 = vmatprep.subr.mxu0 0.0
        %646 = vmatpush1.msra.mxu0 0.0
        %647 = vmatprep.subr.mxu0 0.0
        %648 = vmatpush1.msra.mxu0 0.0
        %649 = vmatprep.subr.mxu0 0.0
        %650 = vmatpush1.msra.mxu0 0.0
        %651 = vmatprep.subr.mxu0 0.0
        %652 = vmatpush1.msra.mxu0 0.0
        %653 = vmatprep.subr.mxu0 0.0
        %654 = vmatpush1.msra.mxu0 0.0
        %655 = vmatprep.subr.mxu0 0.0
        %656 = vmatpush1.msra.mxu0 0.0
        %657 = vmatprep.subr.mxu0 0.0
        %658 = vmatpush1.msra.mxu0 0.0
        %659 = vmatprep.subr.mxu0 0.0
        %660 = vmatpush1.msra.mxu0 0.0
        %661 = vmatprep.subr.mxu0 0.0
        %662 = vmatpush1.msra.mxu0 0.0
        %663 = vmatprep.subr.mxu0 0.0
        %664 = vmatpush1.msra.mxu0 0.0
        %665 = vmatprep.subr.mxu0 0.0
        %666 = vmatpush1.msra.mxu0 0.0
        %667 = vmatprep.mubr.f32.mxu0 0.0
        %668 = vmatmul.mubr.f32.gmra.mrb[0].mxu0 %v601
        %v669 = vpop.f32.mrb[0].mxu0
        %v670 = vadd.f32 0.0, %v669
        %v671 = vpop.f32.mrb[0].mxu0
        %672 = vdwg.mxu0
        %v673 = vld [vmem:[#allocation13] sm:$0xff]
        %v674 = vld [vmem:[#allocation13 + $0x8] sm:$0xff]
        %v675 = vld [vmem:[#allocation13 + $0x10] sm:$0xff]
        %v676 = vld [vmem:[#allocation13 + $0x18] sm:$0xff]
        %v678 = vsel %vm522, %v516, 0
        %680 = vmatprep.subr.mxu0 0.0
        %681 = vmatpush1.msra.mxu0 %v673
        %682 = vmatprep.subr.mxu0 0.0
        %683 = vmatpush1.msra.mxu0 %v674
        %684 = vmatprep.subr.mxu0 0.0
        %685 = vmatpush1.msra.mxu0 %v675
        %686 = vmatprep.subr.mxu0 0.0
        %687 = vmatpush1.msra.mxu0 %v676
        %688 = vmatprep.subr.mxu0 0.0
        %689 = vmatpush1.msra.mxu0 0.0
        %690 = vmatprep.subr.mxu0 0.0
        %691 = vmatpush1.msra.mxu0 0.0
        %692 = vmatprep.subr.mxu0 0.0
        %693 = vmatpush1.msra.mxu0 0.0
        %694 = vmatprep.subr.mxu0 0.0
        %695 = vmatpush1.msra.mxu0 0.0
        %696 = vmatprep.subr.mxu0 0.0
        %697 = vmatpush1.msra.mxu0 0.0
        %698 = vmatprep.subr.mxu0 0.0
        %699 = vmatpush1.msra.mxu0 0.0
        %700 = vmatprep.subr.mxu0 0.0
        %701 = vmatpush1.msra.mxu0 0.0
        %702 = vmatprep.subr.mxu0 0.0
        %703 = vmatpush1.msra.mxu0 0.0
        %704 = vmatprep.subr.mxu0 0.0
        %705 = vmatpush1.msra.mxu0 0.0
        %706 = vmatprep.subr.mxu0 0.0
        %707 = vmatpush1.msra.mxu0 0.0
        %708 = vmatprep.subr.mxu0 0.0
        %709 = vmatpush1.msra.mxu0 0.0
        %710 = vmatprep.subr.mxu0 0.0
        %711 = vmatpush1.msra.mxu0 0.0
        %712 = vmatprep.subr.mxu0 0.0
        %713 = vmatpush1.msra.mxu0 0.0
        %714 = vmatprep.subr.mxu0 0.0
        %715 = vmatpush1.msra.mxu0 0.0
        %716 = vmatprep.subr.mxu0 0.0
        %717 = vmatpush1.msra.mxu0 0.0
        %718 = vmatprep.subr.mxu0 0.0
        %719 = vmatpush1.msra.mxu0 0.0
        %720 = vmatprep.subr.mxu0 0.0
        %721 = vmatpush1.msra.mxu0 0.0
        %722 = vmatprep.subr.mxu0 0.0
        %723 = vmatpush1.msra.mxu0 0.0
        %724 = vmatprep.subr.mxu0 0.0
        %725 = vmatpush1.msra.mxu0 0.0
        %726 = vmatprep.subr.mxu0 0.0
        %727 = vmatpush1.msra.mxu0 0.0
        %728 = vmatprep.subr.mxu0 0.0
        %729 = vmatpush1.msra.mxu0 0.0
        %730 = vmatprep.subr.mxu0 0.0
        %731 = vmatpush1.msra.mxu0 0.0
        %732 = vmatprep.subr.mxu0 0.0
        %733 = vmatpush1.msra.mxu0 0.0
        %734 = vmatprep.subr.mxu0 0.0
        %735 = vmatpush1.msra.mxu0 0.0
        %736 = vmatprep.subr.mxu0 0.0
        %737 = vmatpush1.msra.mxu0 0.0
        %738 = vmatprep.subr.mxu0 0.0
        %739 = vmatpush1.msra.mxu0 0.0
        %740 = vmatprep.subr.mxu0 0.0
        %741 = vmatpush1.msra.mxu0 0.0
        %742 = vmatprep.subr.mxu0 0.0
        %743 = vmatpush1.msra.mxu0 0.0
        %744 = vmatprep.mubr.f32.mxu0 0.0
        %745 = vmatmul.mubr.f32.gmra.mrb[0].mxu0 %v678
        %v746 = vpop.f32.mrb[0].mxu0
        %v747 = vadd.f32 0.0, %v746
        %v748 = vpop.f32.mrb[0].mxu0
        %749 = vdwg.mxu0
        %vm750 = vcmask 64512
        %v752 = vsel %vm750, %v747, 0
        %v755 = vsel %vm750, %v670, 0
        %757 = vmatprep.subr.mxu0 0.0
        %758 = vmatpush1.xpose.msra.mxu0 %v755
        %759 = vmatprep.subr.mxu0 0.0
        %760 = vmatpush1.xpose.msra.mxu0 0.0
        %761 = vmatprep.subr.mxu0 0.0
        %762 = vmatpush1.xpose.msra.mxu0 0.0
        %763 = vmatprep.subr.mxu0 0.0
        %764 = vmatpush1.xpose.msra.mxu0 0.0
        %765 = vmatprep.subr.mxu0 0.0
        %766 = vmatpush1.xpose.msra.mxu0 0.0
        %767 = vmatprep.subr.mxu0 0.0
        %768 = vmatpush1.xpose.msra.mxu0 0.0
        %769 = vmatprep.subr.mxu0 0.0
        %770 = vmatpush1.xpose.msra.mxu0 0.0
        %771 = vmatprep.subr.mxu0 0.0
        %772 = vmatpush1.xpose.msra.mxu0 0.0
        %773 = vmatprep.subr.mxu0 0.0
        %774 = vmatpush1.xpose.msra.mxu0 0.0
        %775 = vmatprep.subr.mxu0 0.0
        %776 = vmatpush1.xpose.msra.mxu0 0.0
        %777 = vmatprep.subr.mxu0 0.0
        %778 = vmatpush1.xpose.msra.mxu0 0.0
        %779 = vmatprep.subr.mxu0 0.0
        %780 = vmatpush1.xpose.msra.mxu0 0.0
        %781 = vmatprep.subr.mxu0 0.0
        %782 = vmatpush1.xpose.msra.mxu0 0.0
        %783 = vmatprep.subr.mxu0 0.0
        %784 = vmatpush1.xpose.msra.mxu0 0.0
        %785 = vmatprep.subr.mxu0 0.0
        %786 = vmatpush1.xpose.msra.mxu0 0.0
        %787 = vmatprep.subr.mxu0 0.0
        %788 = vmatpush1.xpose.msra.mxu0 0.0
        %789 = vmatprep.subr.mxu0 0.0
        %790 = vmatpush1.xpose.msra.mxu0 0.0
        %791 = vmatprep.subr.mxu0 0.0
        %792 = vmatpush1.xpose.msra.mxu0 0.0
        %793 = vmatprep.subr.mxu0 0.0
        %794 = vmatpush1.xpose.msra.mxu0 0.0
        %795 = vmatprep.subr.mxu0 0.0
        %796 = vmatpush1.xpose.msra.mxu0 0.0
        %797 = vmatprep.subr.mxu0 0.0
        %798 = vmatpush1.xpose.msra.mxu0 0.0
        %799 = vmatprep.subr.mxu0 0.0
        %800 = vmatpush1.xpose.msra.mxu0 0.0
        %801 = vmatprep.subr.mxu0 0.0
        %802 = vmatpush1.xpose.msra.mxu0 0.0
        %803 = vmatprep.subr.mxu0 0.0
        %804 = vmatpush1.xpose.msra.mxu0 0.0
        %805 = vmatprep.subr.mxu0 0.0
        %806 = vmatpush1.xpose.msra.mxu0 0.0
        %807 = vmatprep.subr.mxu0 0.0
        %808 = vmatpush1.xpose.msra.mxu0 0.0
        %809 = vmatprep.subr.mxu0 0.0
        %810 = vmatpush1.xpose.msra.mxu0 0.0
        %811 = vmatprep.subr.mxu0 0.0
        %812 = vmatpush1.xpose.msra.mxu0 0.0
        %813 = vmatprep.subr.mxu0 0.0
        %814 = vmatpush1.xpose.msra.mxu0 0.0
        %815 = vmatprep.subr.mxu0 0.0
        %816 = vmatpush1.xpose.msra.mxu0 0.0
        %817 = vmatprep.subr.mxu0 0.0
        %818 = vmatpush1.xpose.msra.mxu0 0.0
        %819 = vmatprep.subr.mxu0 0.0
        %820 = vmatpush1.xpose.msra.mxu0 0.0
        %821 = vmatprep.mubr.f32.mxu0 0.0
        %822 = vmatmul.mubr.f32.gmra.mrb[0].mxu0 %v752
        %v823 = vpop.f32.mrb[0].mxu0
        %v824 = vadd.f32 %v517, %v823
        %v825 = vpop.f32.mrb[0].mxu0
        %826 = vdwg.mxu0
        %v827 = vmul.f32 %v824, 0.17677669
        %v828 = vsel %vm750, %v827, -inf
        %829 = vmax.xlane.f32.xlu0 %v828
        %v830 = vpop.xlane.xlu0 %829
        %v831 = vsub.f32 %v827, %v830
        %v832 = vmul.f32 %v831, 1.442695
        %v833 = vpow.pop %v832
        %v834 = vsel %vm750, %v833, 0.0
        %835 = vadd.xlane.f32.xlu0 %v834
        %v836 = vpop.xlane.xlu0 %835
        %v837 = vrcp.pop %v836
        %v838 = vmul.f32 %v833, %v837
        %v840 = vsel %vm750, %v838, 0
        %842 = vmatprep.subr.mxu0 0.0
        %843 = vmatpush1.msra.mxu0 %v593
        %844 = vmatprep.subr.mxu0 0.0
        %845 = vmatpush1.msra.mxu0 0.0
        %846 = vmatprep.subr.mxu0 0.0
        %847 = vmatpush1.msra.mxu0 0.0
        %848 = vmatprep.subr.mxu0 0.0
        %849 = vmatpush1.msra.mxu0 0.0
        %850 = vmatprep.subr.mxu0 0.0
        %851 = vmatpush1.msra.mxu0 0.0
        %852 = vmatprep.subr.mxu0 0.0
        %853 = vmatpush1.msra.mxu0 0.0
        %854 = vmatprep.subr.mxu0 0.0
        %855 = vmatpush1.msra.mxu0 0.0
        %856 = vmatprep.subr.mxu0 0.0
        %857 = vmatpush1.msra.mxu0 0.0
        %858 = vmatprep.subr.mxu0 0.0
        %859 = vmatpush1.msra.mxu0 0.0
        %860 = vmatprep.subr.mxu0 0.0
        %861 = vmatpush1.msra.mxu0 0.0
        %862 = vmatprep.subr.mxu0 0.0
        %863 = vmatpush1.msra.mxu0 0.0
        %864 = vmatprep.subr.mxu0 0.0
        %865 = vmatpush1.msra.mxu0 0.0
        %866 = vmatprep.subr.mxu0 0.0
        %867 = vmatpush1.msra.mxu0 0.0
        %868 = vmatprep.subr.mxu0 0.0
        %869 = vmatpush1.msra.mxu0 0.0
        %870 = vmatprep.subr.mxu0 0.0
        %871 = vmatpush1.msra.mxu0 0.0
        %872 = vmatprep.subr.mxu0 0.0
        %873 = vmatpush1.msra.mxu0 0.0
        %874 = vmatprep.subr.mxu0 0.0
        %875 = vmatpush1.msra.mxu0 0.0
        %876 = vmatprep.subr.mxu0 0.0
        %877 = vmatpush1.msra.mxu0 0.0
        %878 = vmatprep.subr.mxu0 0.0
        %879 = vmatpush1.msra.mxu0 0.0
        %880 = vmatprep.subr.mxu0 0.0
        %881 = vmatpush1.msra.mxu0 0.0
        %882 = vmatprep.subr.mxu0 0.0
        %883 = vmatpush1.msra.mxu0 0.0
        %884 = vmatprep.subr.mxu0 0.0
        %885 = vmatpush1.msra.mxu0 0.0
        %886 = vmatprep.subr.mxu0 0.0
        %887 = vmatpush1.msra.mxu0 0.0
        %888 = vmatprep.subr.mxu0 0.0
        %889 = vmatpush1.msra.mxu0 0.0
        %890 = vmatprep.subr.mxu0 0.0
        %891 = vmatpush1.msra.mxu0 0.0
        %892 = vmatprep.subr.mxu0 0.0
        %893 = vmatpush1.msra.mxu0 0.0
        %894 = vmatprep.subr.mxu0 0.0
        %895 = vmatpush1.msra.mxu0 0.0
        %896 = vmatprep.subr.mxu0 0.0
        %897 = vmatpush1.msra.mxu0 0.0
        %898 = vmatprep.subr.mxu0 0.0
        %899 = vmatpush1.msra.mxu0 0.0
        %900 = vmatprep.subr.mxu0 0.0
        %901 = vmatpush1.msra.mxu0 0.0
        %902 = vmatprep.subr.mxu0 0.0
        %903 = vmatpush1.msra.mxu0 0.0
        %904 = vmatprep.subr.mxu0 0.0
        %905 = vmatpush1.msra.mxu0 0.0
        %906 = vmatprep.mubr.f32.mxu0 0.0
        %907 = vmatmul.mubr.f32.gmra.mrb[0].mxu0 %v840
        %v908 = vpop.f32.mrb[0].mxu0
        %v909 = vadd.f32 0.0, %v908
        %v910 = vpop.f32.mrb[0].mxu0
        %911 = vdwg.mxu0
        %v912 = vld [vmem:[#allocation14] sm:$0xff]
        %913 = vrot.lane.b32.xlu0 %v747, 120
        %v914 = vpop.permute.xlu0 %913
        %915 = vrot.lane.b32.xlu0 %v670, 120
        %v916 = vpop.permute.xlu0 %915
        %v917 = vsel %vm750, %v914, 0
        %v919 = vsel %vm750, %v916, 0
        %921 = vmatprep.subr.mxu0 0.0
        %922 = vmatpush1.xpose.msra.mxu0 %v919
        %923 = vmatprep.subr.mxu0 0.0
        %924 = vmatpush1.xpose.msra.mxu0 0.0
        %925 = vmatprep.subr.mxu0 0.0
        %926 = vmatpush1.xpose.msra.mxu0 0.0
        %927 = vmatprep.subr.mxu0 0.0
        %928 = vmatpush1.xpose.msra.mxu0 0.0
        %929 = vmatprep.subr.mxu0 0.0
        %930 = vmatpush1.xpose.msra.mxu0 0.0
        %931 = vmatprep.subr.mxu0 0.0
        %932 = vmatpush1.xpose.msra.mxu0 0.0
        %933 = vmatprep.subr.mxu0 0.0
        %934 = vmatpush1.xpose.msra.mxu0 0.0
        %935 = vmatprep.subr.mxu0 0.0
        %936 = vmatpush1.xpose.msra.mxu0 0.0
        %937 = vmatprep.subr.mxu0 0.0
        %938 = vmatpush1.xpose.msra.mxu0 0.0
        %939 = vmatprep.subr.mxu0 0.0
        %940 = vmatpush1.xpose.msra.mxu0 0.0
        %941 = vmatprep.subr.mxu0 0.0
        %942 = vmatpush1.xpose.msra.mxu0 0.0
        %943 = vmatprep.subr.mxu0 0.0
        %944 = vmatpush1.xpose.msra.mxu0 0.0
        %945 = vmatprep.subr.mxu0 0.0
        %946 = vmatpush1.xpose.msra.mxu0 0.0
        %947 = vmatprep.subr.mxu0 0.0
        %948 = vmatpush1.xpose.msra.mxu0 0.0
        %949 = vmatprep.subr.mxu0 0.0
        %950 = vmatpush1.xpose.msra.mxu0 0.0
        %951 = vmatprep.subr.mxu0 0.0
        %952 = vmatpush1.xpose.msra.mxu0 0.0
        %953 = vmatprep.subr.mxu0 0.0
        %954 = vmatpush1.xpose.msra.mxu0 0.0
        %955 = vmatprep.subr.mxu0 0.0
        %956 = vmatpush1.xpose.msra.mxu0 0.0
        %957 = vmatprep.subr.mxu0 0.0
        %958 = vmatpush1.xpose.msra.mxu0 0.0
        %959 = vmatprep.subr.mxu0 0.0
        %960 = vmatpush1.xpose.msra.mxu0 0.0
        %961 = vmatprep.subr.mxu0 0.0
        %962 = vmatpush1.xpose.msra.mxu0 0.0
        %963 = vmatprep.subr.mxu0 0.0
        %964 = vmatpush1.xpose.msra.mxu0 0.0
        %965 = vmatprep.subr.mxu0 0.0
        %966 = vmatpush1.xpose.msra.mxu0 0.0
        %967 = vmatprep.subr.mxu0 0.0
        %968 = vmatpush1.xpose.msra.mxu0 0.0
        %969 = vmatprep.subr.mxu0 0.0
        %970 = vmatpush1.xpose.msra.mxu0 0.0
        %971 = vmatprep.subr.mxu0 0.0
        %972 = vmatpush1.xpose.msra.mxu0 0.0
        %973 = vmatprep.subr.mxu0 0.0
        %974 = vmatpush1.xpose.msra.mxu0 0.0
        %975 = vmatprep.subr.mxu0 0.0
        %976 = vmatpush1.xpose.msra.mxu0 0.0
        %977 = vmatprep.subr.mxu0 0.0
        %978 = vmatpush1.xpose.msra.mxu0 0.0
        %979 = vmatprep.subr.mxu0 0.0
        %980 = vmatpush1.xpose.msra.mxu0 0.0
        %981 = vmatprep.subr.mxu0 0.0
        %982 = vmatpush1.xpose.msra.mxu0 0.0
        %983 = vmatprep.subr.mxu0 0.0
        %984 = vmatpush1.xpose.msra.mxu0 0.0
        %985 = vmatprep.mubr.f32.mxu0 0.0
        %986 = vmatmul.mubr.f32.gmra.mrb[0].mxu0 %v917
        %v987 = vpop.f32.mrb[0].mxu0
        %v988 = vadd.f32 %v517, %v987
        %v989 = vpop.f32.mrb[0].mxu0
        %990 = vdwg.mxu0
        %v991 = vmul.f32 %v988, 0.17677669
        %v992 = vsel %vm750, %v991, -inf
        %993 = vmax.xlane.f32.xlu0 %v992
        %v994 = vpop.xlane.xlu0 %993
        %v995 = vsub.f32 %v991, %v994
        %v996 = vmul.f32 %v995, 1.442695
        %v997 = vpow.pop %v996
        %v998 = vsel %vm750, %v997, 0.0
        %999 = vadd.xlane.f32.xlu0 %v998
        %v1000 = vpop.xlane.xlu0 %999
        %v1001 = vrcp.pop %v1000
        %v1002 = vmul.f32 %v997, %v1001
        %1004 = vrot.lane.b32.xlu0 %v593, 120
        %v1005 = vpop.permute.xlu0 %1004
        %v1008 = vsel %vm750, %v1002, 0
        %1010 = vmatprep.subr.mxu0 0.0
        %1011 = vmatpush1.msra.mxu0 %v1005
        %1012 = vmatprep.subr.mxu0 0.0
        %1013 = vmatpush1.msra.mxu0 0.0
        %1014 = vmatprep.subr.mxu0 0.0
        %1015 = vmatpush1.msra.mxu0 0.0
        %1016 = vmatprep.subr.mxu0 0.0
        %1017 = vmatpush1.msra.mxu0 0.0
        %1018 = vmatprep.subr.mxu0 0.0
        %1019 = vmatpush1.msra.mxu0 0.0
        %1020 = vmatprep.subr.mxu0 0.0
        %1021 = vmatpush1.msra.mxu0 0.0
        %1022 = vmatprep.subr.mxu0 0.0
        %1023 = vmatpush1.msra.mxu0 0.0
        %1024 = vmatprep.subr.mxu0 0.0
        %1025 = vmatpush1.msra.mxu0 0.0
        %1026 = vmatprep.subr.mxu0 0.0
        %1027 = vmatpush1.msra.mxu0 0.0
        %1028 = vmatprep.subr.mxu0 0.0
        %1029 = vmatpush1.msra.mxu0 0.0
        %1030 = vmatprep.subr.mxu0 0.0
        %1031 = vmatpush1.msra.mxu0 0.0
        %1032 = vmatprep.subr.mxu0 0.0
        %1033 = vmatpush1.msra.mxu0 0.0
        %1034 = vmatprep.subr.mxu0 0.0
        %1035 = vmatpush1.msra.mxu0 0.0
        %1036 = vmatprep.subr.mxu0 0.0
        %1037 = vmatpush1.msra.mxu0 0.0
        %1038 = vmatprep.subr.mxu0 0.0
        %1039 = vmatpush1.msra.mxu0 0.0
        %1040 = vmatprep.subr.mxu0 0.0
        %1041 = vmatpush1.msra.mxu0 0.0
        %1042 = vmatprep.subr.mxu0 0.0
        %1043 = vmatpush1.msra.mxu0 0.0
        %1044 = vmatprep.subr.mxu0 0.0
        %1045 = vmatpush1.msra.mxu0 0.0
        %1046 = vmatprep.subr.mxu0 0.0
        %1047 = vmatpush1.msra.mxu0 0.0
        %1048 = vmatprep.subr.mxu0 0.0
        %1049 = vmatpush1.msra.mxu0 0.0
        %1050 = vmatprep.subr.mxu0 0.0
        %1051 = vmatpush1.msra.mxu0 0.0
        %1052 = vmatprep.subr.mxu0 0.0
        %1053 = vmatpush1.msra.mxu0 0.0
        %1054 = vmatprep.subr.mxu0 0.0
        %1055 = vmatpush1.msra.mxu0 0.0
        %1056 = vmatprep.subr.mxu0 0.0
        %1057 = vmatpush1.msra.mxu0 0.0
        %1058 = vmatprep.subr.mxu0 0.0
        %1059 = vmatpush1.msra.mxu0 0.0
        %1060 = vmatprep.subr.mxu0 0.0
        %1061 = vmatpush1.msra.mxu0 0.0
        %1062 = vmatprep.subr.mxu0 0.0
        %1063 = vmatpush1.msra.mxu0 0.0
        %1064 = vmatprep.subr.mxu0 0.0
        %1065 = vmatpush1.msra.mxu0 0.0
        %1066 = vmatprep.subr.mxu0 0.0
        %1067 = vmatpush1.msra.mxu0 0.0
        %1068 = vmatprep.subr.mxu0 0.0
        %1069 = vmatpush1.msra.mxu0 0.0
        %1070 = vmatprep.subr.mxu0 0.0
        %1071 = vmatpush1.msra.mxu0 0.0
        %1072 = vmatprep.subr.mxu0 0.0
        %1073 = vmatpush1.msra.mxu0 0.0
        %1074 = vmatprep.mubr.f32.mxu0 0.0
        %1075 = vmatmul.mubr.f32.gmra.mrb[0].mxu0 %v1008
        %v1076 = vpop.f32.mrb[0].mxu0
        %v1077 = vadd.f32 0.0, %v1076
        %v1078 = vpop.f32.mrb[0].mxu0
        %1079 = vdwg.mxu0
        %v1080 = vld [vmem:[#allocation14 + $0x8] sm:$0xff]
        %v1082 = vsel %vm750, %v1077, 0
        %1084 = vmatprep.subr.mxu0 0.0
        %1085 = vmatpush1.msra.mxu0 %v1080
        %1086 = vmatprep.subr.mxu0 0.0
        %1087 = vmatpush1.msra.mxu0 0.0
        %1088 = vmatprep.subr.mxu0 0.0
        %1089 = vmatpush1.msra.mxu0 0.0
        %1090 = vmatprep.subr.mxu0 0.0
        %1091 = vmatpush1.msra.mxu0 0.0
        %1092 = vmatprep.subr.mxu0 0.0
        %1093 = vmatpush1.msra.mxu0 0.0
        %1094 = vmatprep.subr.mxu0 0.0
        %1095 = vmatpush1.msra.mxu0 0.0
        %1096 = vmatprep.subr.mxu0 0.0
        %1097 = vmatpush1.msra.mxu0 0.0
        %1098 = vmatprep.subr.mxu0 0.0
        %1099 = vmatpush1.msra.mxu0 0.0
        %1100 = vmatprep.subr.mxu0 0.0
        %1101 = vmatpush1.msra.mxu0 0.0
        %1102 = vmatprep.subr.mxu0 0.0
        %1103 = vmatpush1.msra.mxu0 0.0
        %1104 = vmatprep.subr.mxu0 0.0
        %1105 = vmatpush1.msra.mxu0 0.0
        %1106 = vmatprep.subr.mxu0 0.0
        %1107 = vmatpush1.msra.mxu0 0.0
        %1108 = vmatprep.subr.mxu0 0.0
        %1109 = vmatpush1.msra.mxu0 0.0
        %1110 = vmatprep.subr.mxu0 0.0
        %1111 = vmatpush1.msra.mxu0 0.0
        %1112 = vmatprep.subr.mxu0 0.0
        %1113 = vmatpush1.msra.mxu0 0.0
        %1114 = vmatprep.subr.mxu0 0.0
        %1115 = vmatpush1.msra.mxu0 0.0
        %1116 = vmatprep.subr.mxu0 0.0
        %1117 = vmatpush1.msra.mxu0 0.0
        %1118 = vmatprep.subr.mxu0 0.0
        %1119 = vmatpush1.msra.mxu0 0.0
        %1120 = vmatprep.subr.mxu0 0.0
        %1121 = vmatpush1.msra.mxu0 0.0
        %1122 = vmatprep.subr.mxu0 0.0
        %1123 = vmatpush1.msra.mxu0 0.0
        %1124 = vmatprep.subr.mxu0 0.0
        %1125 = vmatpush1.msra.mxu0 0.0
        %1126 = vmatprep.subr.mxu0 0.0
        %1127 = vmatpush1.msra.mxu0 0.0
        %1128 = vmatprep.subr.mxu0 0.0
        %1129 = vmatpush1.msra.mxu0 0.0
        %1130 = vmatprep.subr.mxu0 0.0
        %1131 = vmatpush1.msra.mxu0 0.0
        %1132 = vmatprep.subr.mxu0 0.0
        %1133 = vmatpush1.msra.mxu0 0.0
        %1134 = vmatprep.subr.mxu0 0.0
        %1135 = vmatpush1.msra.mxu0 0.0
        %1136 = vmatprep.subr.mxu0 0.0
        %1137 = vmatpush1.msra.mxu0 0.0
        %1138 = vmatprep.subr.mxu0 0.0
        %1139 = vmatpush1.msra.mxu0 0.0
        %1140 = vmatprep.subr.mxu0 0.0
        %1141 = vmatpush1.msra.mxu0 0.0
        %1142 = vmatprep.subr.mxu0 0.0
        %1143 = vmatpush1.msra.mxu0 0.0
        %1144 = vmatprep.subr.mxu0 0.0
        %1145 = vmatpush1.msra.mxu0 0.0
        %1146 = vmatprep.subr.mxu0 0.0
        %1147 = vmatpush1.msra.mxu0 0.0
        %1148 = vmatprep.mubr.f32.mxu0 0.0
        %1149 = vmatmul.mubr.f32.gmra.mrb[0].mxu0 %v1082
        %v1150 = vpop.f32.mrb[0].mxu0
        %v1151 = vadd.f32 0.0, %v1150
        %v1152 = vpop.f32.mrb[0].mxu0
        %1153 = vdwg.mxu0
        %v1155 = vsel %vm750, %v909, 0
        %1157 = vmatprep.subr.mxu0 0.0
        %1158 = vmatpush1.msra.mxu0 %v912
        %1159 = vmatprep.subr.mxu0 0.0
        %1160 = vmatpush1.msra.mxu0 0.0
        %1161 = vmatprep.subr.mxu0 0.0
        %1162 = vmatpush1.msra.mxu0 0.0
        %1163 = vmatprep.subr.mxu0 0.0
        %1164 = vmatpush1.msra.mxu0 0.0
        %1165 = vmatprep.subr.mxu0 0.0
        %1166 = vmatpush1.msra.mxu0 0.0
        %1167 = vmatprep.subr.mxu0 0.0
        %1168 = vmatpush1.msra.mxu0 0.0
        %1169 = vmatprep.subr.mxu0 0.0
        %1170 = vmatpush1.msra.mxu0 0.0
        %1171 = vmatprep.subr.mxu0 0.0
        %1172 = vmatpush1.msra.mxu0 0.0
        %1173 = vmatprep.subr.mxu0 0.0
        %1174 = vmatpush1.msra.mxu0 0.0
        %1175 = vmatprep.subr.mxu0 0.0
        %1176 = vmatpush1.msra.mxu0 0.0
        %1177 = vmatprep.subr.mxu0 0.0
        %1178 = vmatpush1.msra.mxu0 0.0
        %1179 = vmatprep.subr.mxu0 0.0
        %1180 = vmatpush1.msra.mxu0 0.0
        %1181 = vmatprep.subr.mxu0 0.0
        %1182 = vmatpush1.msra.mxu0 0.0
        %1183 = vmatprep.subr.mxu0 0.0
        %1184 = vmatpush1.msra.mxu0 0.0
        %1185 = vmatprep.subr.mxu0 0.0
        %1186 = vmatpush1.msra.mxu0 0.0
        %1187 = vmatprep.subr.mxu0 0.0
        %1188 = vmatpush1.msra.mxu0 0.0
        %1189 = vmatprep.subr.mxu0 0.0
        %1190 = vmatpush1.msra.mxu0 0.0
        %1191 = vmatprep.subr.mxu0 0.0
        %1192 = vmatpush1.msra.mxu0 0.0
        %1193 = vmatprep.subr.mxu0 0.0
        %1194 = vmatpush1.msra.mxu0 0.0
        %1195 = vmatprep.subr.mxu0 0.0
        %1196 = vmatpush1.msra.mxu0 0.0
        %1197 = vmatprep.subr.mxu0 0.0
        %1198 = vmatpush1.msra.mxu0 0.0
        %1199 = vmatprep.subr.mxu0 0.0
        %1200 = vmatpush1.msra.mxu0 0.0
        %1201 = vmatprep.subr.mxu0 0.0
        %1202 = vmatpush1.msra.mxu0 0.0
        %1203 = vmatprep.subr.mxu0 0.0
        %1204 = vmatpush1.msra.mxu0 0.0
        %1205 = vmatprep.subr.mxu0 0.0
        %1206 = vmatpush1.msra.mxu0 0.0
        %1207 = vmatprep.subr.mxu0 0.0
        %1208 = vmatpush1.msra.mxu0 0.0
        %1209 = vmatprep.subr.mxu0 0.0
        %1210 = vmatpush1.msra.mxu0 0.0
        %1211 = vmatprep.subr.mxu0 0.0
        %1212 = vmatpush1.msra.mxu0 0.0
        %1213 = vmatprep.subr.mxu0 0.0
        %1214 = vmatpush1.msra.mxu0 0.0
        %1215 = vmatprep.subr.mxu0 0.0
        %1216 = vmatpush1.msra.mxu0 0.0
        %1217 = vmatprep.subr.mxu0 0.0
        %1218 = vmatpush1.msra.mxu0 0.0
        %1219 = vmatprep.subr.mxu0 0.0
        %1220 = vmatpush1.msra.mxu0 0.0
        %1221 = vmatprep.mubr.f32.mxu0 0.0
        %1222 = vmatmul.mubr.f32.gmra.mrb[0].mxu0 %v1155
        %v1223 = vpop.f32.mrb[0].mxu0
        %v1224 = vadd.f32 %v1151, %v1223
        %v1225 = vpop.f32.mrb[0].mxu0
        %1226 = vdwg.mxu0
        %1227 = vrot.lane.b32.xlu0 %v747, 112
        %v1228 = vpop.permute.xlu0 %1227
        %1229 = vrot.lane.b32.xlu0 %v670, 112
        %v1230 = vpop.permute.xlu0 %1229
        %v1231 = vsel %vm750, %v1228, 0
        %v1233 = vsel %vm750, %v1230, 0
        %1235 = vmatprep.subr.mxu0 0.0
        %1236 = vmatpush1.xpose.msra.mxu0 %v1233
        %1237 = vmatprep.subr.mxu0 0.0
        %1238 = vmatpush1.xpose.msra.mxu0 0.0
        %1239 = vmatprep.subr.mxu0 0.0
        %1240 = vmatpush1.xpose.msra.mxu0 0.0
        %1241 = vmatprep.subr.mxu0 0.0
        %1242 = vmatpush1.xpose.msra.mxu0 0.0
        %1243 = vmatprep.subr.mxu0 0.0
        %1244 = vmatpush1.xpose.msra.mxu0 0.0
        %1245 = vmatprep.subr.mxu0 0.0
        %1246 = vmatpush1.xpose.msra.mxu0 0.0
        %1247 = vmatprep.subr.mxu0 0.0
        %1248 = vmatpush1.xpose.msra.mxu0 0.0
        %1249 = vmatprep.subr.mxu0 0.0
        %1250 = vmatpush1.xpose.msra.mxu0 0.0
        %1251 = vmatprep.subr.mxu0 0.0
        %1252 = vmatpush1.xpose.msra.mxu0 0.0
        %1253 = vmatprep.subr.mxu0 0.0
        %1254 = vmatpush1.xpose.msra.mxu0 0.0
        %1255 = vmatprep.subr.mxu0 0.0
        %1256 = vmatpush1.xpose.msra.mxu0 0.0
        %1257 = vmatprep.subr.mxu0 0.0
        %1258 = vmatpush1.xpose.msra.mxu0 0.0
        %1259 = vmatprep.subr.mxu0 0.0
        %1260 = vmatpush1.xpose.msra.mxu0 0.0
        %1261 = vmatprep.subr.mxu0 0.0
        %1262 = vmatpush1.xpose.msra.mxu0 0.0
        %1263 = vmatprep.subr.mxu0 0.0
        %1264 = vmatpush1.xpose.msra.mxu0 0.0
        %1265 = vmatprep.subr.mxu0 0.0
        %1266 = vmatpush1.xpose.msra.mxu0 0.0
        %1267 = vmatprep.subr.mxu0 0.0
        %1268 = vmatpush1.xpose.msra.mxu0 0.0
        %1269 = vmatprep.subr.mxu0 0.0
        %1270 = vmatpush1.xpose.msra.mxu0 0.0
        %1271 = vmatprep.subr.mxu0 0.0
        %1272 = vmatpush1.xpose.msra.mxu0 0.0
        %1273 = vmatprep.subr.mxu0 0.0
        %1274 = vmatpush1.xpose.msra.mxu0 0.0
        %1275 = vmatprep.subr.mxu0 0.0
        %1276 = vmatpush1.xpose.msra.mxu0 0.0
        %1277 = vmatprep.subr.mxu0 0.0
        %1278 = vmatpush1.xpose.msra.mxu0 0.0
        %1279 = vmatprep.subr.mxu0 0.0
        %1280 = vmatpush1.xpose.msra.mxu0 0.0
        %1281 = vmatprep.subr.mxu0 0.0
        %1282 = vmatpush1.xpose.msra.mxu0 0.0
        %1283 = vmatprep.subr.mxu0 0.0
        %1284 = vmatpush1.xpose.msra.mxu0 0.0
        %1285 = vmatprep.subr.mxu0 0.0
        %1286 = vmatpush1.xpose.msra.mxu0 0.0
        %1287 = vmatprep.subr.mxu0 0.0
        %1288 = vmatpush1.xpose.msra.mxu0 0.0
        %1289 = vmatprep.subr.mxu0 0.0
        %1290 = vmatpush1.xpose.msra.mxu0 0.0
        %1291 = vmatprep.subr.mxu0 0.0
        %1292 = vmatpush1.xpose.msra.mxu0 0.0
        %1293 = vmatprep.subr.mxu0 0.0
        %1294 = vmatpush1.xpose.msra.mxu0 0.0
        %1295 = vmatprep.subr.mxu0 0.0
        %1296 = vmatpush1.xpose.msra.mxu0 0.0
        %1297 = vmatprep.subr.mxu0 0.0
        %1298 = vmatpush1.xpose.msra.mxu0 0.0
        %1299 = vmatprep.mubr.f32.mxu0 0.0
        %1300 = vmatmul.mubr.f32.gmra.mrb[0].mxu0 %v1231
        %v1301 = vpop.f32.mrb[0].mxu0
        %v1302 = vadd.f32 %v517, %v1301
        %v1303 = vpop.f32.mrb[0].mxu0
        %1304 = vdwg.mxu0
        %v1305 = vmul.f32 %v1302, 0.17677669
        %v1306 = vsel %vm750, %v1305, -inf
        %1307 = vmax.xlane.f32.xlu0 %v1306
        %v1308 = vpop.xlane.xlu0 %1307
        %v1309 = vsub.f32 %v1305, %v1308
        %v1310 = vmul.f32 %v1309, 1.442695
        %v1311 = vpow.pop %v1310
        %v1312 = vsel %vm750, %v1311, 0.0
        %1313 = vadd.xlane.f32.xlu0 %v1312
        %v1314 = vpop.xlane.xlu0 %1313
        %v1315 = vrcp.pop %v1314
        %v1316 = vmul.f32 %v1311, %v1315
        %1317 = vrot.lane.b32.xlu0 %v593, 112
        %v1318 = vpop.permute.xlu0 %1317
        %v1321 = vsel %vm750, %v1316, 0
        %1323 = vmatprep.subr.mxu0 0.0
        %1324 = vmatpush1.msra.mxu0 %v1318
        %1325 = vmatprep.subr.mxu0 0.0
        %1326 = vmatpush1.msra.mxu0 0.0
        %1327 = vmatprep.subr.mxu0 0.0
        %1328 = vmatpush1.msra.mxu0 0.0
        %1329 = vmatprep.subr.mxu0 0.0
        %1330 = vmatpush1.msra.mxu0 0.0
        %1331 = vmatprep.subr.mxu0 0.0
        %1332 = vmatpush1.msra.mxu0 0.0
        %1333 = vmatprep.subr.mxu0 0.0
        %1334 = vmatpush1.msra.mxu0 0.0
        %1335 = vmatprep.subr.mxu0 0.0
        %1336 = vmatpush1.msra.mxu0 0.0
        %1337 = vmatprep.subr.mxu0 0.0
        %1338 = vmatpush1.msra.mxu0 0.0
        %1339 = vmatprep.subr.mxu0 0.0
        %1340 = vmatpush1.msra.mxu0 0.0
        %1341 = vmatprep.subr.mxu0 0.0
        %1342 = vmatpush1.msra.mxu0 0.0
        %1343 = vmatprep.subr.mxu0 0.0
        %1344 = vmatpush1.msra.mxu0 0.0
        %1345 = vmatprep.subr.mxu0 0.0
        %1346 = vmatpush1.msra.mxu0 0.0
        %1347 = vmatprep.subr.mxu0 0.0
        %1348 = vmatpush1.msra.mxu0 0.0
        %1349 = vmatprep.subr.mxu0 0.0
        %1350 = vmatpush1.msra.mxu0 0.0
        %1351 = vmatprep.subr.mxu0 0.0
        %1352 = vmatpush1.msra.mxu0 0.0
        %1353 = vmatprep.subr.mxu0 0.0
        %1354 = vmatpush1.msra.mxu0 0.0
        %1355 = vmatprep.subr.mxu0 0.0
        %1356 = vmatpush1.msra.mxu0 0.0
        %1357 = vmatprep.subr.mxu0 0.0
        %1358 = vmatpush1.msra.mxu0 0.0
        %1359 = vmatprep.subr.mxu0 0.0
        %1360 = vmatpush1.msra.mxu0 0.0
        %1361 = vmatprep.subr.mxu0 0.0
        %1362 = vmatpush1.msra.mxu0 0.0
        %1363 = vmatprep.subr.mxu0 0.0
        %1364 = vmatpush1.msra.mxu0 0.0
        %1365 = vmatprep.subr.mxu0 0.0
        %1366 = vmatpush1.msra.mxu0 0.0
        %1367 = vmatprep.subr.mxu0 0.0
        %1368 = vmatpush1.msra.mxu0 0.0
        %1369 = vmatprep.subr.mxu0 0.0
        %1370 = vmatpush1.msra.mxu0 0.0
        %1371 = vmatprep.subr.mxu0 0.0
        %1372 = vmatpush1.msra.mxu0 0.0
        %1373 = vmatprep.subr.mxu0 0.0
        %1374 = vmatpush1.msra.mxu0 0.0
        %1375 = vmatprep.subr.mxu0 0.0
        %1376 = vmatpush1.msra.mxu0 0.0
        %1377 = vmatprep.subr.mxu0 0.0
        %1378 = vmatpush1.msra.mxu0 0.0
        %1379 = vmatprep.subr.mxu0 0.0
        %1380 = vmatpush1.msra.mxu0 0.0
        %1381 = vmatprep.subr.mxu0 0.0
        %1382 = vmatpush1.msra.mxu0 0.0
        %1383 = vmatprep.subr.mxu0 0.0
        %1384 = vmatpush1.msra.mxu0 0.0
        %1385 = vmatprep.subr.mxu0 0.0
        %1386 = vmatpush1.msra.mxu0 0.0
        %1387 = vmatprep.mubr.f32.mxu0 0.0
        %1388 = vmatmul.mubr.f32.gmra.mrb[0].mxu0 %v1321
        %v1389 = vpop.f32.mrb[0].mxu0
        %v1390 = vadd.f32 0.0, %v1389
        %v1391 = vpop.f32.mrb[0].mxu0
        %1392 = vdwg.mxu0
        %v1393 = vld [vmem:[#allocation14 + $0x10] sm:$0xff]
        %v1395 = vsel %vm750, %v1390, 0
        %1397 = vmatprep.subr.mxu0 0.0
        %1398 = vmatpush1.msra.mxu0 %v1393
        %1399 = vmatprep.subr.mxu0 0.0
        %1400 = vmatpush1.msra.mxu0 0.0
        %1401 = vmatprep.subr.mxu0 0.0
        %1402 = vmatpush1.msra.mxu0 0.0
        %1403 = vmatprep.subr.mxu0 0.0
        %1404 = vmatpush1.msra.mxu0 0.0
        %1405 = vmatprep.subr.mxu0 0.0
        %1406 = vmatpush1.msra.mxu0 0.0
        %1407 = vmatprep.subr.mxu0 0.0
        %1408 = vmatpush1.msra.mxu0 0.0
        %1409 = vmatprep.subr.mxu0 0.0
        %1410 = vmatpush1.msra.mxu0 0.0
        %1411 = vmatprep.subr.mxu0 0.0
        %1412 = vmatpush1.msra.mxu0 0.0
        %1413 = vmatprep.subr.mxu0 0.0
        %1414 = vmatpush1.msra.mxu0 0.0
        %1415 = vmatprep.subr.mxu0 0.0
        %1416 = vmatpush1.msra.mxu0 0.0
        %1417 = vmatprep.subr.mxu0 0.0
        %1418 = vmatpush1.msra.mxu0 0.0
        %1419 = vmatprep.subr.mxu0 0.0
        %1420 = vmatpush1.msra.mxu0 0.0
        %1421 = vmatprep.subr.mxu0 0.0
        %1422 = vmatpush1.msra.mxu0 0.0
        %1423 = vmatprep.subr.mxu0 0.0
        %1424 = vmatpush1.msra.mxu0 0.0
        %1425 = vmatprep.subr.mxu0 0.0
        %1426 = vmatpush1.msra.mxu0 0.0
        %1427 = vmatprep.subr.mxu0 0.0
        %1428 = vmatpush1.msra.mxu0 0.0
        %1429 = vmatprep.subr.mxu0 0.0
        %1430 = vmatpush1.msra.mxu0 0.0
        %1431 = vmatprep.subr.mxu0 0.0
        %1432 = vmatpush1.msra.mxu0 0.0
        %1433 = vmatprep.subr.mxu0 0.0
        %1434 = vmatpush1.msra.mxu0 0.0
        %1435 = vmatprep.subr.mxu0 0.0
        %1436 = vmatpush1.msra.mxu0 0.0
        %1437 = vmatprep.subr.mxu0 0.0
        %1438 = vmatpush1.msra.mxu0 0.0
        %1439 = vmatprep.subr.mxu0 0.0
        %1440 = vmatpush1.msra.mxu0 0.0
        %1441 = vmatprep.subr.mxu0 0.0
        %1442 = vmatpush1.msra.mxu0 0.0
        %1443 = vmatprep.subr.mxu0 0.0
        %1444 = vmatpush1.msra.mxu0 0.0
        %1445 = vmatprep.subr.mxu0 0.0
        %1446 = vmatpush1.msra.mxu0 0.0
        %1447 = vmatprep.subr.mxu0 0.0
        %1448 = vmatpush1.msra.mxu0 0.0
        %1449 = vmatprep.subr.mxu0 0.0
        %1450 = vmatpush1.msra.mxu0 0.0
        %1451 = vmatprep.subr.mxu0 0.0
        %1452 = vmatpush1.msra.mxu0 0.0
        %1453 = vmatprep.subr.mxu0 0.0
        %1454 = vmatpush1.msra.mxu0 0.0
        %1455 = vmatprep.subr.mxu0 0.0
        %1456 = vmatpush1.msra.mxu0 0.0
        %1457 = vmatprep.subr.mxu0 0.0
        %1458 = vmatpush1.msra.mxu0 0.0
        %1459 = vmatprep.subr.mxu0 0.0
        %1460 = vmatpush1.msra.mxu0 0.0
        %1461 = vmatprep.mubr.f32.mxu0 0.0
        %1462 = vmatmul.mubr.f32.gmra.mrb[0].mxu0 %v1395
        %v1463 = vpop.f32.mrb[0].mxu0
        %v1464 = vadd.f32 0.0, %v1463
        %v1465 = vpop.f32.mrb[0].mxu0
        %1466 = vdwg.mxu0
        %v1467 = vadd.f32 %v1224, %v1464
        %1468 = vrot.lane.b32.xlu0 %v747, 104
        %v1469 = vpop.permute.xlu0 %1468
        %1470 = vrot.lane.b32.xlu0 %v670, 104
        %v1471 = vpop.permute.xlu0 %1470
        %v1472 = vsel %vm750, %v1469, 0
        %v1474 = vsel %vm750, %v1471, 0
        %1476 = vmatprep.subr.mxu0 0.0
        %1477 = vmatpush1.xpose.msra.mxu0 %v1474
        %1478 = vmatprep.subr.mxu0 0.0
        %1479 = vmatpush1.xpose.msra.mxu0 0.0
        %1480 = vmatprep.subr.mxu0 0.0
        %1481 = vmatpush1.xpose.msra.mxu0 0.0
        %1482 = vmatprep.subr.mxu0 0.0
        %1483 = vmatpush1.xpose.msra.mxu0 0.0
        %1484 = vmatprep.subr.mxu0 0.0
        %1485 = vmatpush1.xpose.msra.mxu0 0.0
        %1486 = vmatprep.subr.mxu0 0.0
        %1487 = vmatpush1.xpose.msra.mxu0 0.0
        %1488 = vmatprep.subr.mxu0 0.0
        %1489 = vmatpush1.xpose.msra.mxu0 0.0
        %1490 = vmatprep.subr.mxu0 0.0
        %1491 = vmatpush1.xpose.msra.mxu0 0.0
        %1492 = vmatprep.subr.mxu0 0.0
        %1493 = vmatpush1.xpose.msra.mxu0 0.0
        %1494 = vmatprep.subr.mxu0 0.0
        %1495 = vmatpush1.xpose.msra.mxu0 0.0
        %1496 = vmatprep.subr.mxu0 0.0
        %1497 = vmatpush1.xpose.msra.mxu0 0.0
        %1498 = vmatprep.subr.mxu0 0.0
        %1499 = vmatpush1.xpose.msra.mxu0 0.0
        %1500 = vmatprep.subr.mxu0 0.0
        %1501 = vmatpush1.xpose.msra.mxu0 0.0
        %1502 = vmatprep.subr.mxu0 0.0
        %1503 = vmatpush1.xpose.msra.mxu0 0.0
        %1504 = vmatprep.subr.mxu0 0.0
        %1505 = vmatpush1.xpose.msra.mxu0 0.0
        %1506 = vmatprep.subr.mxu0 0.0
        %1507 = vmatpush1.xpose.msra.mxu0 0.0
        %1508 = vmatprep.subr.mxu0 0.0
        %1509 = vmatpush1.xpose.msra.mxu0 0.0
        %1510 = vmatprep.subr.mxu0 0.0
        %1511 = vmatpush1.xpose.msra.mxu0 0.0
        %1512 = vmatprep.subr.mxu0 0.0
        %1513 = vmatpush1.xpose.msra.mxu0 0.0
        %1514 = vmatprep.subr.mxu0 0.0
        %1515 = vmatpush1.xpose.msra.mxu0 0.0
        %1516 = vmatprep.subr.mxu0 0.0
        %1517 = vmatpush1.xpose.msra.mxu0 0.0
        %1518 = vmatprep.subr.mxu0 0.0
        %1519 = vmatpush1.xpose.msra.mxu0 0.0
        %1520 = vmatprep.subr.mxu0 0.0
        %1521 = vmatpush1.xpose.msra.mxu0 0.0
        %1522 = vmatprep.subr.mxu0 0.0
        %1523 = vmatpush1.xpose.msra.mxu0 0.0
        %1524 = vmatprep.subr.mxu0 0.0
        %1525 = vmatpush1.xpose.msra.mxu0 0.0
        %1526 = vmatprep.subr.mxu0 0.0
        %1527 = vmatpush1.xpose.msra.mxu0 0.0
        %1528 = vmatprep.subr.mxu0 0.0
        %1529 = vmatpush1.xpose.msra.mxu0 0.0
        %1530 = vmatprep.subr.mxu0 0.0
        %1531 = vmatpush1.xpose.msra.mxu0 0.0
        %1532 = vmatprep.subr.mxu0 0.0
        %1533 = vmatpush1.xpose.msra.mxu0 0.0
        %1534 = vmatprep.subr.mxu0 0.0
        %1535 = vmatpush1.xpose.msra.mxu0 0.0
        %1536 = vmatprep.subr.mxu0 0.0
        %1537 = vmatpush1.xpose.msra.mxu0 0.0
        %1538 = vmatprep.subr.mxu0 0.0
        %1539 = vmatpush1.xpose.msra.mxu0 0.0
        %1540 = vmatprep.mubr.f32.mxu0 0.0
        %1541 = vmatmul.mubr.f32.gmra.mrb[0].mxu0 %v1472
        %v1542 = vpop.f32.mrb[0].mxu0
        %v1543 = vadd.f32 %v517, %v1542
        %v1544 = vpop.f32.mrb[0].mxu0
        %1545 = vdwg.mxu0
        %v1546 = vmul.f32 %v1543, 0.17677669
        %v1547 = vsel %vm750, %v1546, -inf
        %1548 = vmax.xlane.f32.xlu0 %v1547
        %v1549 = vpop.xlane.xlu0 %1548
        %v1550 = vsub.f32 %v1546, %v1549
        %v1551 = vmul.f32 %v1550, 1.442695
        %v1552 = vpow.pop %v1551
        %v1553 = vsel %vm750, %v1552, 0.0
        %1554 = vadd.xlane.f32.xlu0 %v1553
        %v1555 = vpop.xlane.xlu0 %1554
        %v1556 = vrcp.pop %v1555
        %v1557 = vmul.f32 %v1552, %v1556
        %1558 = vrot.lane.b32.xlu0 %v593, 104
        %v1559 = vpop.permute.xlu0 %1558
        %v1562 = vsel %vm750, %v1557, 0
        %1564 = vmatprep.subr.mxu0 0.0
        %1565 = vmatpush1.msra.mxu0 %v1559
        %1566 = vmatprep.subr.mxu0 0.0
        %1567 = vmatpush1.msra.mxu0 0.0
        %1568 = vmatprep.subr.mxu0 0.0
        %1569 = vmatpush1.msra.mxu0 0.0
        %1570 = vmatprep.subr.mxu0 0.0
        %1571 = vmatpush1.msra.mxu0 0.0
        %1572 = vmatprep.subr.mxu0 0.0
        %1573 = vmatpush1.msra.mxu0 0.0
        %1574 = vmatprep.subr.mxu0 0.0
        %1575 = vmatpush1.msra.mxu0 0.0
        %1576 = vmatprep.subr.mxu0 0.0
        %1577 = vmatpush1.msra.mxu0 0.0
        %1578 = vmatprep.subr.mxu0 0.0
        %1579 = vmatpush1.msra.mxu0 0.0
        %1580 = vmatprep.subr.mxu0 0.0
        %1581 = vmatpush1.msra.mxu0 0.0
        %1582 = vmatprep.subr.mxu0 0.0
        %1583 = vmatpush1.msra.mxu0 0.0
        %1584 = vmatprep.subr.mxu0 0.0
        %1585 = vmatpush1.msra.mxu0 0.0
        %1586 = vmatprep.subr.mxu0 0.0
        %1587 = vmatpush1.msra.mxu0 0.0
        %1588 = vmatprep.subr.mxu0 0.0
        %1589 = vmatpush1.msra.mxu0 0.0
        %1590 = vmatprep.subr.mxu0 0.0
        %1591 = vmatpush1.msra.mxu0 0.0
        %1592 = vmatprep.subr.mxu0 0.0
        %1593 = vmatpush1.msra.mxu0 0.0
        %1594 = vmatprep.subr.mxu0 0.0
        %1595 = vmatpush1.msra.mxu0 0.0
        %1596 = vmatprep.subr.mxu0 0.0
        %1597 = vmatpush1.msra.mxu0 0.0
        %1598 = vmatprep.subr.mxu0 0.0
        %1599 = vmatpush1.msra.mxu0 0.0
        %1600 = vmatprep.subr.mxu0 0.0
        %1601 = vmatpush1.msra.mxu0 0.0
        %1602 = vmatprep.subr.mxu0 0.0
        %1603 = vmatpush1.msra.mxu0 0.0
        %1604 = vmatprep.subr.mxu0 0.0
        %1605 = vmatpush1.msra.mxu0 0.0
        %1606 = vmatprep.subr.mxu0 0.0
        %1607 = vmatpush1.msra.mxu0 0.0
        %1608 = vmatprep.subr.mxu0 0.0
        %1609 = vmatpush1.msra.mxu0 0.0
        %1610 = vmatprep.subr.mxu0 0.0
        %1611 = vmatpush1.msra.mxu0 0.0
        %1612 = vmatprep.subr.mxu0 0.0
        %1613 = vmatpush1.msra.mxu0 0.0
        %1614 = vmatprep.subr.mxu0 0.0
        %1615 = vmatpush1.msra.mxu0 0.0
        %1616 = vmatprep.subr.mxu0 0.0
        %1617 = vmatpush1.msra.mxu0 0.0
        %1618 = vmatprep.subr.mxu0 0.0
        %1619 = vmatpush1.msra.mxu0 0.0
        %1620 = vmatprep.subr.mxu0 0.0
        %1621 = vmatpush1.msra.mxu0 0.0
        %1622 = vmatprep.subr.mxu0 0.0
        %1623 = vmatpush1.msra.mxu0 0.0
        %1624 = vmatprep.subr.mxu0 0.0
        %1625 = vmatpush1.msra.mxu0 0.0
        %1626 = vmatprep.subr.mxu0 0.0
        %1627 = vmatpush1.msra.mxu0 0.0
        %1628 = vmatprep.mubr.f32.mxu0 0.0
        %1629 = vmatmul.mubr.f32.gmra.mrb[0].mxu0 %v1562
        %v1630 = vpop.f32.mrb[0].mxu0
        %v1631 = vadd.f32 0.0, %v1630
        %v1632 = vpop.f32.mrb[0].mxu0
        %1633 = vdwg.mxu0
        %v1634 = vld [vmem:[#allocation14 + $0x18] sm:$0xff]
        %v1636 = vsel %vm750, %v1631, 0
        %1638 = vmatprep.subr.mxu0 0.0
        %1639 = vmatpush1.msra.mxu0 %v1634
        %1640 = vmatprep.subr.mxu0 0.0
        %1641 = vmatpush1.msra.mxu0 0.0
        %1642 = vmatprep.subr.mxu0 0.0
        %1643 = vmatpush1.msra.mxu0 0.0
        %1644 = vmatprep.subr.mxu0 0.0
        %1645 = vmatpush1.msra.mxu0 0.0
        %1646 = vmatprep.subr.mxu0 0.0
        %1647 = vmatpush1.msra.mxu0 0.0
        %1648 = vmatprep.subr.mxu0 0.0
        %1649 = vmatpush1.msra.mxu0 0.0
        %1650 = vmatprep.subr.mxu0 0.0
        %1651 = vmatpush1.msra.mxu0 0.0
        %1652 = vmatprep.subr.mxu0 0.0
        %1653 = vmatpush1.msra.mxu0 0.0
        %1654 = vmatprep.subr.mxu0 0.0
        %1655 = vmatpush1.msra.mxu0 0.0
        %1656 = vmatprep.subr.mxu0 0.0
        %1657 = vmatpush1.msra.mxu0 0.0
        %1658 = vmatprep.subr.mxu0 0.0
        %1659 = vmatpush1.msra.mxu0 0.0
        %1660 = vmatprep.subr.mxu0 0.0
        %1661 = vmatpush1.msra.mxu0 0.0
        %1662 = vmatprep.subr.mxu0 0.0
        %1663 = vmatpush1.msra.mxu0 0.0
        %1664 = vmatprep.subr.mxu0 0.0
        %1665 = vmatpush1.msra.mxu0 0.0
        %1666 = vmatprep.subr.mxu0 0.0
        %1667 = vmatpush1.msra.mxu0 0.0
        %1668 = vmatprep.subr.mxu0 0.0
        %1669 = vmatpush1.msra.mxu0 0.0
        %1670 = vmatprep.subr.mxu0 0.0
        %1671 = vmatpush1.msra.mxu0 0.0
        %1672 = vmatprep.subr.mxu0 0.0
        %1673 = vmatpush1.msra.mxu0 0.0
        %1674 = vmatprep.subr.mxu0 0.0
        %1675 = vmatpush1.msra.mxu0 0.0
        %1676 = vmatprep.subr.mxu0 0.0
        %1677 = vmatpush1.msra.mxu0 0.0
        %1678 = vmatprep.subr.mxu0 0.0
        %1679 = vmatpush1.msra.mxu0 0.0
        %1680 = vmatprep.subr.mxu0 0.0
        %1681 = vmatpush1.msra.mxu0 0.0
        %1682 = vmatprep.subr.mxu0 0.0
        %1683 = vmatpush1.msra.mxu0 0.0
        %1684 = vmatprep.subr.mxu0 0.0
        %1685 = vmatpush1.msra.mxu0 0.0
        %1686 = vmatprep.subr.mxu0 0.0
        %1687 = vmatpush1.msra.mxu0 0.0
        %1688 = vmatprep.subr.mxu0 0.0
        %1689 = vmatpush1.msra.mxu0 0.0
        %1690 = vmatprep.subr.mxu0 0.0
        %1691 = vmatpush1.msra.mxu0 0.0
        %1692 = vmatprep.subr.mxu0 0.0
        %1693 = vmatpush1.msra.mxu0 0.0
        %1694 = vmatprep.subr.mxu0 0.0
        %1695 = vmatpush1.msra.mxu0 0.0
        %1696 = vmatprep.subr.mxu0 0.0
        %1697 = vmatpush1.msra.mxu0 0.0
        %1698 = vmatprep.subr.mxu0 0.0
        %1699 = vmatpush1.msra.mxu0 0.0
        %1700 = vmatprep.subr.mxu0 0.0
        %1701 = vmatpush1.msra.mxu0 0.0
        %1702 = vmatprep.mubr.f32.mxu0 0.0
        %1703 = vmatmul.mubr.f32.gmra.mrb[0].mxu0 %v1636
        %v1704 = vpop.f32.mrb[0].mxu0
        %v1705 = vadd.f32 0.0, %v1704
        %v1706 = vpop.f32.mrb[0].mxu0
        %1707 = vdwg.mxu0
        %v1708 = vadd.f32 %v1467, %v1705
        %v1709 = vld [vmem:[%s8] sm:$0x1]
        %v1711 = vlaneseq
        %v1712 = vshrl.u32 %v1711, 7
        %v1713 = vsub.s32 0, %v1712
        %v1714 = vrot.slane %v1709, %v1713
        %v1716 = vadd.f32 %v1708, %v1714
        %1717 = vst.msk [vmem:[%s513] sm:$0xff] %vm522, %v1716
        %s1718 = sand.u32 %s251, 1
        %s1719 = scalar_lea.sflag [#allocation4], %s1718
        %s1720 = sand.u32 %s251, 1
        %s1721 = smul.addr %s1720, 8
        %s1722 = scalar_lea.vmem [#allocation16], %s1721
        // Predicated region
        $region89: #{tpu_custom_call.1} parent=55 // pred_check
          %p1723 = pneg %p261
        $region90: #{tpu_custom_call.1} parent=55 // pred_check_branch
          %1725 = sbr.rel (%p1723) target = $region92
        $region91: #{tpu_custom_call.1} parent=55 // pred_region
          %s1727 = ssub.s32 128, 128
          %1728 = vsyncadd %s1719, %s1727
          %s1729 = smul.addr %s34, 128
          %s1730 = scalar_lea.hbm %s9, %s1729
          %s1732 = sshll.u32 %s1722, 4
          %s1733 = int_to_ptr.vmem [resolvable:$true] %s1732
          %1735 = dma.vmem_to_hbm [thread:$0]  %s1733, 128, %s1730, %s1719
        $region92: #{tpu_custom_call.1} parent=55 // pred_fallthru
          _
      $region56: #{tpu_custom_call.1} parent=5 // pred_fallthru
        _
      %p1736 = scmp.le.s32.totalorder 2, %s29
      // Predicated region
      $region93: #{tpu_custom_call.1} parent=5 // pred_check
        %p1737 = pneg %p1736
      $region94: #{tpu_custom_call.1} parent=5 // pred_check_branch
        %1739 = sbr.rel (%p1737) target = $region96
      $region95: #{tpu_custom_call.1} parent=5 // pred_region
        %s1740 = ssub.s32 %s29, 2
        // Predicated region
        $region97: #{tpu_custom_call.1} parent=95 // pred_check
          %p1741 = pneg %p267
        $region98: #{tpu_custom_call.1} parent=95 // pred_check_branch
          %1743 = sbr.rel (%p1741) target = $region100
        $region99: #{tpu_custom_call.1} parent=95 // pred_region
          %s1744 = sand.u32 %s252, 1
          %s1745 = scalar_lea.sflag [#allocation4], %s1744
          %s1746 = sand.u32 %s252, 1
          %s1747 = smul.addr %s1746, 8
          %s1748 = scalar_lea.vmem [#allocation16], %s1747
          %1749 = dma.done %s1745, 128
        $region100: #{tpu_custom_call.1} parent=95 // pred_fallthru
          _
      $region96: #{tpu_custom_call.1} parent=5 // pred_fallthru
        _
    $region6: #{tpu_custom_call.1} parent=1 // loop_footer
      %s33 = sadd.s32 1, %s29
    $region7: #{tpu_custom_call.1} parent=1 // loop_footer_branch
      %28 = sbr.rel target = $region3
    $region8: #{tpu_custom_call.1} parent=1 // loop_exit
      _
    %1750 = vsyncpa [#allocation3], 1
    %s1751 = scalar_lea.sflag [#allocation3], 1
    %1752 = vsyncpa %s1751, 1
    %1753 = vsyncpa [#allocation6], 1
    %s1754 = scalar_lea.sflag [#allocation6], 1
    %1755 = vsyncpa %s1754, 1
    %1756 = vsyncpa [#allocation9], 1
    %s1757 = scalar_lea.sflag [#allocation9], 1
    %1758 = vsyncpa %s1757, 1
    %1759 = vsyncpa [#allocation12], 1
    %1760 = vsyncpa [#allocation15], 1
    %1761 = vsyncpa [#allocation4], 1
    %s1762 = scalar_lea.sflag [#allocation4], 1
    %1763 = vsyncpa %s1762, 1

</llo_original>
